<compile_context>
chip_gen: v5e
topology: v5e:2x2
jax: 0.10.0
libtpu: 0.0.40
codegen_flags: <defaults>
</compile_context>

<pallas_src>
import math
import functools
from functools import partial

import jax
import jax.numpy as jnp
from jax.experimental import pallas as pl
from jax.experimental.pallas import tpu as pltpu

ACT_DTYPE = jnp.bfloat16          # storage dtype for activations / matmul weights
_BN_EPS = 1e-5
_BN_SCALE = 1.0 / math.sqrt(1.0 + _BN_EPS)   # eval BN: gamma=1, beta=0, mean=0, var=1
_MM_ROW_CAP = 1024                # row tile cap for the matmul kernel (sweepable)
_VMEM_LIMIT = 48 * 1024 * 1024    # explicit limit: safe on v5e/v6e (128 MiB) and v7x (64 MiB)


def _cparams(*sem):
    return pltpu.CompilerParams(dimension_semantics=sem, vmem_limit_bytes=_VMEM_LIMIT)


def _apply_act(y, act):
    if act == "relu":
        return jnp.maximum(y, 0.0)
    if act == "relu6":
        return jnp.clip(y, 0.0, 6.0)
    return y


def _largest_divisor(n, cap):
    cap = max(1, min(n, cap))
    for d in range(cap, 0, -1):
        if n % d == 0:
            return d
    return 1


# ----------------------------------------------------------------------------
# Kernel 1: fused matmul + bias [+ residual] + activation   (1x1 convs, interp)
# ----------------------------------------------------------------------------
def _mm_kernel(x_ref, w_ref, b_ref, o_ref, *, act):
    y = jnp.dot(x_ref[...], w_ref[...], preferred_element_type=jnp.float32)
    y = y + b_ref[...]
    o_ref[...] = _apply_act(y, act).astype(o_ref.dtype)


def _mm_res_kernel(x_ref, w_ref, b_ref, r_ref, o_ref, *, act):
    y = jnp.dot(x_ref[...], w_ref[...], preferred_element_type=jnp.float32)
    y = y + b_ref[...] + r_ref[...].astype(jnp.float32)
    o_ref[...] = _apply_act(y, act).astype(o_ref.dtype)


@functools.lru_cache(maxsize=None)
def _mm_call(Pp, tp, K, Cout, act, has_res, out_dtype):
    in_specs = [
        pl.BlockSpec((tp, K), lambda i: (i, 0)),
        pl.BlockSpec((K, Cout), lambda i: (0, 0)),
        pl.BlockSpec((1, Cout), lambda i: (0, 0)),
    ]
    if has_res:
        in_specs.append(pl.BlockSpec((tp, Cout), lambda i: (i, 0)))
        kern = partial(_mm_res_kernel, act=act)
    else:
        kern = partial(_mm_kernel, act=act)
    fn = pl.pallas_call(
        kern,
        out_shape=jax.ShapeDtypeStruct((Pp, Cout), out_dtype),
        grid=(Pp // tp,),
        in_specs=in_specs,
        out_specs=pl.BlockSpec((tp, Cout), lambda i: (i, 0)),
        compiler_params=_cparams("parallel"),
    )
    return jax.jit(fn)


def _row_tile(P):
    if P <= _MM_ROW_CAP:
        tp = P if P % 8 == 0 else ((P + 7) // 8) * 8
        return tp, tp
    Pp = ((P + _MM_ROW_CAP - 1) // _MM_ROW_CAP) * _MM_ROW_CAP
    return _MM_ROW_CAP, Pp


def matmul_bias_act(x, w, bias, act="none", residual=None, out_dtype=None):
    """(P,K) @ (K,Cout) + bias [+residual], activation.  BN scale is pre-folded in w."""
    P, K = x.shape
    Cout = w.shape[1]
    out_dtype = out_dtype or ACT_DTYPE
    tp, Pp = _row_tile(P)
    if Pp != P:                               # rare (tiny P); static check -> usually no-op
        x = jnp.pad(x, ((0, Pp - P), (0, 0)))
        if residual is not None:
            residual = jnp.pad(residual, ((0, Pp - P), (0, 0)))
    args = [x, w, bias.reshape(1, Cout).astype(jnp.float32)]
    if residual is not None:
        args.append(residual)
    out = _mm_call(Pp, tp, K, Cout, act, residual is not None, out_dtype)(*args)
    return out[:P] if Pp != P else out


def conv1x1(x, w, bias, act="none", residual=None):
    N, H, W, Cin = x.shape
    Cout = w.shape[1]
    res2 = residual.reshape(N * H * W, Cout) if residual is not None else None
    y = matmul_bias_act(x.reshape(N * H * W, Cin), w, bias, act, res2)
    return y.reshape(N, H, W, Cout)


# ----------------------------------------------------------------------------
# Kernel 2: depthwise 3x3 conv, in-kernel 9-tap FMA (no patch tensor in HBM)
# ----------------------------------------------------------------------------
def _dw_kernel(x_ref, w_ref, b_ref, o_ref, *, taps, th, wo, act):
    r = pl.program_id(1)
    c = o_ref.shape[3]
    acc = jnp.zeros((th, wo, c), jnp.float32)
    for (p, di, dj, ti) in taps:
        slab = x_ref[0, p, pl.ds(r * th + di, th), pl.ds(dj, wo), :]
        acc = acc + slab.astype(jnp.float32) * w_ref[ti]
    y = _apply_act(acc + b_ref[0], act)
    o_ref[...] = y[None].astype(o_ref.dtype)


@functools.lru_cache(maxsize=None)
def _dw_call(N, nph, Hph, Wph, C, Ho, Wo, th, taps, act, out_dtype):
    kern = partial(_dw_kernel, taps=taps, th=th, wo=Wo, act=act)
    fn = pl.pallas_call(
        kern,
        out_shape=jax.ShapeDtypeStruct((N, Ho, Wo, C), out_dtype),
        grid=(N, Ho // th),
        in_specs=[
            pl.BlockSpec((1, nph, Hph, Wph, C), lambda n, r: (n, 0, 0, 0, 0)),
            pl.BlockSpec((9, C), lambda n, r: (0, 0)),
            pl.BlockSpec((1, C), lambda n, r: (0, 0)),
        ],
        out_specs=pl.BlockSpec((1, th, Wo, C), lambda n, r: (n, r, 0, 0)),
        compiler_params=_cparams("parallel", "parallel"),
    )
    return jax.jit(fn)


def depthwise_conv3x3(x, w9, bias, stride, act="none"):
    """x: NHWC; w9: (9, C) f32 (BN scale folded); k=3, pad=1, stride in {1,2}."""
    N, H, W, C = x.shape
    xp = jnp.pad(x, ((0, 0), (1, 1), (1, 1), (0, 0)))
    if stride == 1:
        xs = xp[:, None]                                      # (N,1,H+2,W+2,C)  (free)
        taps = tuple((0, di, dj, di * 3 + dj) for di in range(3) for dj in range(3))
        Ho, Wo = H, W
    else:
        assert H % 2 == 0 and W % 2 == 0, "stride-2 depthwise expects even H, W"
        # stride handled by a 4-phase split of the input so the in-kernel taps stay unit-stride
        phases = [xp[:, pi::2, pj::2, :] for pi in range(2) for pj in range(2)]
        xs = jnp.stack(phases, axis=1)                        # (N,4,(H+2)//2,(W+2)//2,C)
        taps = tuple(((di % 2) * 2 + (dj % 2), di // 2, dj // 2, di * 3 + dj)
                     for di in range(3) for dj in range(3))
        Ho, Wo = H // 2, W // 2
    nph, Hph, Wph = xs.shape[1], xs.shape[2], xs.shape[3]
    th = _largest_divisor(Ho, max(1, 2048 // max(Wo, 1)))
    return _dw_call(N, nph, Hph, Wph, C, Ho, Wo, th, taps, act, ACT_DTYPE)(
        xs, w9, bias.reshape(1, C).astype(jnp.float32))


# ----------------------------------------------------------------------------
# Kernel 3: generic "tap conv": in-kernel tap gather + MXU matmuls + bias + act
#           (used for full 3x3 convs and transposed-conv sub-pixel phases)
# ----------------------------------------------------------------------------
def _tapconv_kernel(x_ref, w_ref, b_ref, o_ref, *, taps, th, wo, act):
    r = pl.program_id(1)
    cout = o_ref.shape[3]
    b = b_ref[0]
    for t in range(th):
        oh = r * th + t
        acc = jnp.zeros((wo, cout), jnp.float32)
        for (ti, di, dj) in taps:
            slab = x_ref[0, pl.ds(oh + di, 1), pl.ds(dj, wo), :][0]     # (wo, Cin)
            acc = acc + jnp.dot(slab, w_ref[ti], preferred_element_type=jnp.float32)
        y = _apply_act(acc + b, act)
        o_ref[0, t] = y.astype(o_ref.dtype)


@functools.lru_cache(maxsize=None)
def _tapconv_call(N, Hp, Wp, Cin, Cout, Ho, Wo, th, taps, act, out_dtype):
    T = len(taps)
    kern = partial(_tapconv_kernel, taps=taps, th=th, wo=Wo, act=act)
    fn = pl.pallas_call(
        kern,
        out_shape=jax.ShapeDtypeStruct((N, Ho, Wo, Cout), out_dtype),
        grid=(N, Ho // th),
        in_specs=[
            pl.BlockSpec((1, Hp, Wp, Cin), lambda n, r: (n, 0, 0, 0)),   # resident per batch
            pl.BlockSpec((T, Cin, Cout), lambda n, r: (0, 0, 0)),
            pl.BlockSpec((1, Cout), lambda n, r: (0, 0)),
        ],
        out_specs=pl.BlockSpec((1, th, Wo, Cout), lambda n, r: (n, r, 0, 0)),
        compiler_params=_cparams("parallel", "parallel"),
    )
    return jax.jit(fn)


def tapconv(xp, w_taps, bias, taps, Ho, Wo, act="none", out_dtype=None):
    """xp: pre-padded NHWC (N,Hp,Wp,Cin); w_taps: (T,Cin,Cout); taps: ((ti,di,dj),...)."""
    N, Hp, Wp, Cin = xp.shape
    Cout = w_taps.shape[-1]
    out_dtype = out_dtype or ACT_DTYPE
    th = _largest_divisor(Ho, 8)
    return _tapconv_call(N, Hp, Wp, Cin, Cout, Ho, Wo, th, taps, act, out_dtype)(
        xp, w_taps, bias.reshape(1, Cout).astype(jnp.float32))


def conv3x3(x, w, bias, act="none"):
    """Full 3x3 conv, stride 1, pad 1.  w: (3,3,Cin,Cout) with BN scale folded."""
    N, H, W, Cin = x.shape
    Cout = w.shape[-1]
    xp = jnp.pad(x, ((0, 0), (1, 1), (1, 1), (0, 0)))
    w_taps = w.reshape(9, Cin, Cout)
    taps = tuple((di * 3 + dj, di, dj) for di in range(3) for dj in range(3))
    return tapconv(xp, w_taps, bias, taps, H, W, act)


# ConvTranspose2d(k=3, stride=2, padding=1, output_padding=1): 4-phase decomposition.
# o[2a+py, 2b+px] = sum over kernel taps (i,j) listed below of inp[a+da, b+db] @ W[i,j]
_PHASE_TAPS = {
    (0, 0): ((1, 1),),
    (0, 1): ((1, 2), (1, 0)),
    (1, 0): ((2, 1), (0, 1)),
    (1, 1): ((2, 2), (2, 0), (0, 2), (0, 0)),
}


def conv_transpose3x3_s2(x, w, bias, out_dtype=None):
    """ConvTranspose2d(3, stride=2, pad=1, output_pad=1, bias=False) + BN (scale folded).
    x: (N,H,W,Cin); w[i,j,ci,co] = torch_weight[ci,co,i,j] * bn_scale; out: (N,2H,2W,Cout)."""
    N, H, W, Cin = x.shape
    Cout = w.shape[-1]
    out_dtype = out_dtype or ACT_DTYPE
    xp = jnp.pad(x, ((0, 0), (0, 1), (0, 1), (0, 0)))   # zeros for the a+1 / b+1 taps

    def phase(py, px):
        w_list, taps = [], []
        for t, (i, j) in enumerate(_PHASE_TAPS[(py, px)]):
            da = 0 if py == 0 else (1 - i // 2)
            db = 0 if px == 0 else (1 - j // 2)
            w_list.append(w[i, j])
            taps.append((t, da, db))
        return tapconv(xp, jnp.stack(w_list, 0), bias, tuple(taps), H, W,
                       act="none", out_dtype=out_dtype)

    ee, eo, oe, oo = phase(0, 0), phase(0, 1), phase(1, 0), phase(1, 1)
    row_e = jnp.stack([ee, eo], axis=3)                 # (N,H,W,2,C)
    row_o = jnp.stack([oe, oo], axis=3)
    out = jnp.stack([row_e, row_o], axis=2)             # (N,H,2,W,2,C)
    return out.reshape(N, 2 * H, 2 * W, Cout)


# ----------------------------------------------------------------------------
# Kernel 4: correlation cost volume (single pass over featL / featR)
# ----------------------------------------------------------------------------
def _volume_kernel(fl_ref, frp_ref, o_ref, *, D, W, inv_c):
    fl = fl_ref[0].astype(jnp.float32)                  # (H, W, C)
    for d in range(D):
        fr = frp_ref[0, :, pl.ds(D - 1 - d, W), :].astype(jnp.float32)
        o_ref[0, d] = (jnp.sum(fl * fr, axis=-1) * inv_c).astype(o_ref.dtype)


@functools.lru_cache(maxsize=None)
def _volume_call(N, H, W, C, D, out_dtype):
    kern = partial(_volume_kernel, D=D, W=W, inv_c=1.0 / C)
    fn = pl.pallas_call(
        kern,
        out_shape=jax.ShapeDtypeStruct((N, D, H, W), out_dtype),
        grid=(N,),
        in_specs=[
            pl.BlockSpec((1, H, W, C), lambda n: (n, 0, 0, 0)),
            pl.BlockSpec((1, H, W + D - 1, C), lambda n: (n, 0, 0, 0)),
        ],
        out_specs=pl.BlockSpec((1, D, H, W), lambda n: (n, 0, 0, 0)),
        compiler_params=_cparams("parallel"),
    )
    return jax.jit(fn)


def volume_build(featL, featR, D):
    # TODO(synk): the original `volume_build` definition was not provided; stand-in is a
    # shift-correlation (per-disparity channel-mean) cost volume, built in one Pallas pass.
    N, H, W, C = featL.shape
    frp = jnp.pad(featR, ((0, 0), (0, 0), (D - 1, 0), (0, 0)))
    vol = _volume_call(N, H, W, C, D, ACT_DTYPE)(featL, frp)   # (N, D, H, W)
    return jnp.transpose(vol, (0, 2, 3, 1))                    # NHWC with C = D


# ----------------------------------------------------------------------------
# Kernel 5: fused softmax over disparity + disparity regression
# ----------------------------------------------------------------------------
def _softmax_disp_kernel(x_ref, d_ref, o_ref):
    x = x_ref[...]                                      # (D, T)
    m = jnp.max(x, axis=0, keepdims=True)
    e = jnp.exp(x - m)
    s = jnp.sum(e, axis=0, keepdims=True)
    num = jnp.sum(e * d_ref[...], axis=0, keepdims=True)
    o_ref[...] = num * pl.reciprocal(s, approx=True)


@functools.lru_cache(maxsize=None)
def _softmax_call(D, Pp, tp):
    fn = pl.pallas_call(
        _softmax_disp_kernel,
        out_shape=jax.ShapeDtypeStruct((1, Pp), jnp.float32),
        grid=(Pp // tp,),
        in_specs=[pl.BlockSpec((D, tp), lambda i: (0, i)),
                  pl.BlockSpec((D, 1), lambda i: (0, 0))],
        out_specs=pl.BlockSpec((1, tp), lambda i: (0, i)),
        compiler_params=_cparams("parallel"),
    )
    return jax.jit(fn)


def softmax_disparity_regression(cost, maxdisp):
    """cost: (N, D, H, W) f32 -> sum_d d * softmax_d(cost) -> (N, H, W)."""
    N, D, H, W = cost.shape
    P = N * H * W
    x = cost.transpose(1, 0, 2, 3).reshape(D, P).astype(jnp.float32)
    cap = 4096
    if P <= cap:
        tp = P if P % 128 == 0 else ((P + 127) // 128) * 128
    else:
        tp = cap
    Pp = ((P + tp - 1) // tp) * tp
    if Pp != P:
        x = jnp.pad(x, ((0, 0), (0, Pp - P)))
    disp = jnp.arange(D, dtype=jnp.float32).reshape(D, 1)
    out = _softmax_call(D, Pp, tp)(x, disp)
    return out[0, :P].reshape(N, H, W)


# ----------------------------------------------------------------------------
# Trilinear upsample (separable -> three interpolation matmuls on the MXU)
# ----------------------------------------------------------------------------
def _interp_matrix(n_out, n_in):
    # PyTorch linear interp, align_corners=False
    if n_in == 1:
        return jnp.ones((n_out, 1), jnp.float32)
    scale = n_in / n_out
    i = jnp.arange(n_out)
    src = jnp.clip((i + 0.5) * scale - 0.5, 0.0, n_in - 1)
    lo = jnp.floor(src).astype(jnp.int32)
    hi = jnp.minimum(lo + 1, n_in - 1)
    whi = src - lo.astype(jnp.float32)
    M = jnp.zeros((n_out, n_in), jnp.float32)
    M = M.at[i, lo].add(1.0 - whi).at[i, hi].add(whi)
    return M


def trilinear_upsample(cost, maxdisp, H_out, W_out):
    """cost: (N, Hf, Wf, C) -> (N, maxdisp, H_out, W_out) (trilinear, align_corners=False)."""
    N, Hf, Wf, C = cost.shape
    zeros = lambda c: jnp.zeros((c,), jnp.float32)
    Md = _interp_matrix(maxdisp, C).T.astype(ACT_DTYPE)
    Mw = _interp_matrix(W_out, Wf).T.astype(ACT_DTYPE)
    Mh = _interp_matrix(H_out, Hf).T.astype(ACT_DTYPE)
    x = matmul_bias_act(cost.reshape(N * Hf * Wf, C), Md, zeros(maxdisp))
    x = x.reshape(N, Hf, Wf, maxdisp).transpose(0, 1, 3, 2).reshape(N * Hf * maxdisp, Wf)
    x = matmul_bias_act(x, Mw, zeros(W_out)).reshape(N, Hf, maxdisp, W_out)
    x = x.transpose(0, 2, 3, 1).reshape(N * maxdisp * W_out, Hf)
    x = matmul_bias_act(x, Mh, zeros(H_out), out_dtype=jnp.float32)
    x = x.reshape(N, maxdisp, W_out, H_out)
    return x.transpose(0, 1, 3, 2)


# ----------------------------------------------------------------------------
# Parameters (deterministic synthetic init matching the module's shapes; BN folded)
# ----------------------------------------------------------------------------
class KeyGen:
    def __init__(self, key):
        self.key = key

    def __call__(self):
        self.key, sub = jax.random.split(self.key)
        return sub


def _conv_w(kg, cin, cout, k):
    std = math.sqrt(2.0 / (k * k * cout))       # m.weight.data.normal_(0, sqrt(2/n))
    return jax.random.normal(kg(), (k, k, cin, cout), jnp.float32) * std


def make_conv1x1_bn(kg, cin, cout):
    w = _conv_w(kg, cin, cout, 1)[0, 0] * _BN_SCALE
    return {"w": w.astype(ACT_DTYPE), "b": jnp.zeros((cout,), jnp.float32)}


def make_conv3x3_bn(kg, cin, cout, with_bn=True):
    w = _conv_w(kg, cin, cout, 3)
    if with_bn:
        w = w * _BN_SCALE
    return {"w": w.astype(ACT_DTYPE), "b": jnp.zeros((cout,), jnp.float32)}


def make_dw_bn(kg, c):
    std = math.sqrt(2.0 / (9 * c))
    w = jax.random.normal(kg(), (3, 3, c), jnp.float32) * std * _BN_SCALE
    return {"w": w.reshape(9, c), "b": jnp.zeros((c,), jnp.float32)}


def make_mv2(kg, inp, oup, stride, expanse):
    hidden = inp * expanse
    p = {"stride": stride, "expanse": expanse, "use_res": (stride == 1 and inp == oup)}
    if expanse != 1:
        p["pw1"] = make_conv1x1_bn(kg, inp, hidden)
    p["dw"] = make_dw_bn(kg, hidden)
    p["pw2"] = make_conv1x1_bn(kg, hidden, oup)
    return p


def mv2_forward(p, x, post_act="none"):
    """MobileV2_Residual; a ReLU following the block (outer Sequential) is fused via post_act."""
    h = x
    if p["expanse"] != 1:
        h = conv1x1(h, p["pw1"]["w"], p["pw1"]["b"], act="relu6")
    h = depthwise_conv3x3(h, p["dw"]["w"], p["dw"]["b"], stride=p["stride"], act="relu6")
    res = x if p["use_res"] else None
    return conv1x1(h, p["pw2"]["w"], p["pw2"]["b"], act=post_act, residual=res)


def make_hourglass(kg, c):
    er = 2
    return {"conv1": make_mv2(kg, c, 2 * c, 2, er),
            "conv2": make_mv2(kg, 2 * c, 2 * c, 1, er),
            "conv3": make_mv2(kg, 2 * c, 4 * c, 2, er),
            "conv4": make_mv2(kg, 4 * c, 4 * c, 1, er),
            "conv5": make_conv3x3_bn(kg, 4 * c, 2 * c),     # ConvTranspose2d + BN weights
            "conv6": make_conv3x3_bn(kg, 2 * c, c),         # ConvTranspose2d + BN weights
            "redir1": make_mv2(kg, c, c, 1, er),
            "redir2": make_mv2(kg, 2 * c, 2 * c, 1, er)}


def hourglass_forward(p, x):
    c1 = mv2_forward(p["conv1"], x)
    c2 = mv2_forward(p["conv2"], c1)
    c3 = mv2_forward(p["conv3"], c2)
    c4 = mv2_forward(p["conv4"], c3)
    c5 = conv_transpose3x3_s2(c4, p["conv5"]["w"], p["conv5"]["b"])
    c5 = jnp.maximum(c5 + mv2_forward(p["redir2"], c2), 0).astype(ACT_DTYPE)
    c6 = conv_transpose3x3_s2(c5, p["conv6"]["w"], p["conv6"]["b"])
    c6 = jnp.maximum(c6 + mv2_forward(p["redir1"], x), 0).astype(ACT_DTYPE)
    return c6


def make_classif(kg, c):
    return {"cbn": make_conv3x3_bn(kg, c, c),
            "conv": make_conv3x3_bn(kg, c, c, with_bn=False)}


def classif_forward(p, x):
    h = conv3x3(x, p["cbn"]["w"], p["cbn"]["b"], act="relu")
    return conv3x3(h, p["conv"]["w"], p["conv"]["b"], act="none")


# TODO(synk): the original `feature_extraction` backbone definition was not provided;
# this stand-in produces 32-channel features at 1/4 resolution like the original.
def make_feature_extraction(kg):
    return {"b1": make_mv2(kg, 3, 16, 2, 3), "b2": make_mv2(kg, 16, 32, 2, 3)}


def feature_extraction_forward(p, x):
    h = mv2_forward(p["b1"], x, post_act="relu")
    return mv2_forward(p["b2"], h, post_act="relu")


# ----------------------------------------------------------------------------
# ASNet
# ----------------------------------------------------------------------------
def make_asnet(key, maxdisp):
    kg = KeyGen(key)
    volume_size, hg_size, dres_er = 48, 32, 3
    return {"maxdisp": maxdisp, "volume_size": volume_size, "hg_size": hg_size,
            "feat": make_feature_extraction(kg),
            "dres0": [make_mv2(kg, volume_size, hg_size, 1, dres_er),
                      make_mv2(kg, hg_size, hg_size, 1, dres_er)],
            "dres1": [make_mv2(kg, hg_size, hg_size, 1, dres_er),
                      make_mv2(kg, hg_size, hg_size, 1, dres_er)],
            "hg1": make_hourglass(kg, hg_size),
            "hg2": make_hourglass(kg, hg_size),
            "hg3": make_hourglass(kg, hg_size),
            "classif0": make_classif(kg, hg_size),
            "classif1": make_classif(kg, hg_size),
            "classif2": make_classif(kg, hg_size),
            "classif3": make_classif(kg, hg_size)}


def asnet_forward(params, L, R, training=False):
    """L, R: NCHW float32 (PyTorch convention). Returns list of (N, H, W) disparities."""
    maxdisp = params["maxdisp"]
    H_in, W_in = L.shape[2], L.shape[3]
    Ln = jnp.transpose(L, (0, 2, 3, 1)).astype(ACT_DTYPE)
    Rn = jnp.transpose(R, (0, 2, 3, 1)).astype(ACT_DTYPE)

    featL = feature_extraction_forward(params["feat"], Ln)
    featR = feature_extraction_forward(params["feat"], Rn)
    xall0 = volume_build(featL, featR, params["volume_size"])

    cost0 = mv2_forward(params["dres0"][0], xall0, post_act="relu")
    cost0 = mv2_forward(params["dres0"][1], cost0, post_act="relu")
    h = mv2_forward(params["dres1"][0], cost0, post_act="relu")
    cost0 = (mv2_forward(params["dres1"][1], h) + cost0).astype(ACT_DTYPE)

    out1 = hourglass_forward(params["hg1"], cost0)
    out2 = hourglass_forward(params["hg2"], out1)
    out3 = hourglass_forward(params["hg3"], out2)

    def head(cp, feat):
        c = classif_forward(cp, feat)                        # (N, Hf, Wf, hg_size)
        c = trilinear_upsample(c, maxdisp, H_in, W_in)       # (N, maxdisp, H, W) f32
        return softmax_disparity_regression(c, maxdisp)      # (N, H, W)

    if training:
        return [head(params["classif0"], cost0), head(params["classif1"], out1),
                head(params["classif2"], out2), head(params["classif3"], out3)]
    return [head(params["classif3"], out3)]


if __name__ == "__main__":
    key = jax.random.PRNGKey(0)
    kp, kl, kr = jax.random.split(key, 3)
    maxdisp = 8
    params = make_asnet(kp, maxdisp)
    # small, deterministic stereo pair (batch=1, RGB, 32x32; features at 8x8)
    L = jax.random.normal(kl, (1, 3, 32, 32), jnp.float32)
    R = jax.random.normal(kr, (1, 3, 32, 32), jnp.float32)
    preds = asnet_forward(params, L, R, training=False)      # inference branch
    preds = jax.block_until_ready(preds)
    assert preds[0].shape == (1, 32, 32)
    assert bool(jnp.all(jnp.isfinite(preds[0])))
    print("KERNEL_OK")
</pallas_src>

<mosaic_0001>
module attributes {stable_mosaic.version = 11 : i64} {
  func.func @_mm_kernel(%arg0: i32, %arg1: memref<1024x3xbf16, #tpu.memory_space<vmem>>, %arg2: memref<3x9xbf16, #tpu.memory_space<vmem>>, %arg3: memref<1x9xf32, #tpu.memory_space<vmem>>, %arg4: memref<1024x9xbf16, #tpu.memory_space<vmem>>) attributes {dimension_semantics = [#tpu.dimension_semantics<parallel>], iteration_bounds = array<i64: 1>, scalar_prefetch = 0 : i64, scratch_operands = 0 : i64, tpu.core_type = #tpu.core_type<tc>, window_params = [{transform_indices = @transform_0, window_bounds = array<i64: 1024, 3>}, {pipeline_mode = #tpu.pipeline_mode<synchronous>, transform_indices = @transform_1, window_bounds = array<i64: 3, 9>}, {pipeline_mode = #tpu.pipeline_mode<synchronous>, transform_indices = @transform_2, window_bounds = array<i64: 1, 9>}, {transform_indices = @transform_3, window_bounds = array<i64: 1024, 9>}]} {
    %c0 = arith.constant 0 : index
    %c0_0 = arith.constant 0 : index
    %0 = vector.load %arg1[%c0, %c0_0] : memref<1024x3xbf16, #tpu.memory_space<vmem>>, vector<1024x3xbf16>
    %c0_1 = arith.constant 0 : index
    %c0_2 = arith.constant 0 : index
    %1 = vector.load %arg2[%c0_1, %c0_2] : memref<3x9xbf16, #tpu.memory_space<vmem>>, vector<3x9xbf16>
    %cst = arith.constant dense<0.000000e+00> : vector<1024x9xf32>
    %2 = tpu.matmul %0, %1, %cst {dimension_numbers = #tpu.dot_dimension_numbers<[1], [0], [0], [1], [0, 0, 1, 1], [], []>} : vector<1024x3xbf16>, vector<3x9xbf16>, vector<1024x9xf32> -> vector<1024x9xf32>
    %c0_3 = arith.constant 0 : index
    %c0_4 = arith.constant 0 : index
    %3 = vector.load %arg3[%c0_3, %c0_4] : memref<1x9xf32, #tpu.memory_space<vmem>>, vector<1x9xf32>
    %4 = vector.broadcast %3 : vector<1x9xf32> to vector<1024x9xf32>
    %5 = arith.addf %2, %4 : vector<1024x9xf32>
    %cst_5 = arith.constant 0.000000e+00 : f32
    %cst_6 = arith.constant 6.000000e+00 : f32
    %6 = vector.broadcast %cst_5 : f32 to vector<1024x9xf32>
    %7 = arith.maximumf %6, %5 : vector<1024x9xf32>
    %8 = vector.broadcast %cst_6 : f32 to vector<1024x9xf32>
    %9 = arith.minimumf %8, %7 : vector<1024x9xf32>
    %10 = arith.truncf %9 : vector<1024x9xf32> to vector<1024x9xbf16>
    %c0_7 = arith.constant 0 : index
    %c0_8 = arith.constant 0 : index
    %11 = vector.load %arg4[%c0_7, %c0_8] : memref<1024x9xbf16, #tpu.memory_space<vmem>>, vector<1024x9xbf16>
    tpu.vector_store %arg4[%c0_7, %c0_8], %10 {strides = array<i32>} : memref<1024x9xbf16, #tpu.memory_space<vmem>>, vector<1024x9xbf16>,
    return
  }
  func.func @transform_0(%arg0: i32) -> (i32, i32) {
    %c0_i32 = arith.constant 0 : i32
    %c0_i32_0 = arith.constant 0 : i32
    return %arg0, %c0_i32 : i32, i32
  }
  func.func @transform_1(%arg0: i32) -> (i32, i32) {
    %c0_i32 = arith.constant 0 : i32
    %c0_i32_0 = arith.constant 0 : i32
    %c0_i32_1 = arith.constant 0 : i32
    return %c0_i32, %c0_i32_0 : i32, i32
  }
  func.func @transform_2(%arg0: i32) -> (i32, i32) {
    %c0_i32 = arith.constant 0 : i32
    %c0_i32_0 = arith.constant 0 : i32
    %c0_i32_1 = arith.constant 0 : i32
    return %c0_i32, %c0_i32_0 : i32, i32
  }
  func.func @transform_3(%arg0: i32) -> (i32, i32) {
    %c0_i32 = arith.constant 0 : i32
    %c0_i32_0 = arith.constant 0 : i32
    return %arg0, %c0_i32 : i32, i32
  }
}

</mosaic_0001>

<llo_original>
// kernel: tpu_custom_call.1
$region0: #{tpu_custom_call.1}
  #allocation0 [shape = 'u32[]', space=smem, size = 0x4, offset = 0x4, fixed_abs, tag = 'smem constant byte address 0x4 - core index']
  #allocation1 [shape = 'u32[72,128]{1,0:T(1,128)}', space=vmem, size = 0x9000, scoped, tag = 'internal scratch']
  %s0 = inlined_call_operand.vmem [shape: bf16[1024,3], index: 0, kind: input, shape index: {}]
  %s1 = inlined_call_operand.vmem [shape: bf16[3,9], index: 1, kind: input, shape index: {}]
  %s2 = inlined_call_operand.vmem [shape: f32[1,9], index: 2, kind: input, shape index: {}]
  %s3 = inlined_call_operand.vmem [shape: bf16[1024,9], index: 3, kind: output, shape index: {}]
  %s4 = sld [smem:[#allocation0]]
  $region22: #{tpu_custom_call.1} parent=0
    _
  %s6 = ssub.s32 1, %s4
  %s7 = scalar_select 0, %s6, %s4
  // Predicated region
  $region2: #{tpu_custom_call.1} parent=0 // pred_check
    _
  $region3: #{tpu_custom_call.1} parent=0 // pred_check_branch
    %9 = sbr.rel (0) target = $region5
  $region4: #{tpu_custom_call.1} parent=0 // pred_region
    _
  $region5: #{tpu_custom_call.1} parent=0 // pred_fallthru
    _
  // Predicated region
  $region6: #{tpu_custom_call.1} parent=0 // pred_check
    _
  $region7: #{tpu_custom_call.1} parent=0 // pred_check_branch
    %11 = sbr.rel (0) target = $region9
  $region8: #{tpu_custom_call.1} parent=0 // pred_region
    _
  $region9: #{tpu_custom_call.1} parent=0 // pred_fallthru
    _
  // Predicated region
  $region10: #{tpu_custom_call.1} parent=0 // pred_check
    _
  $region11: #{tpu_custom_call.1} parent=0 // pred_check_branch
    %13 = sbr.rel (0) target = $region13
  $region12: #{tpu_custom_call.1} parent=0 // pred_region
    _
  $region13: #{tpu_custom_call.1} parent=0 // pred_fallthru
    _
  %v15 = vld [vmem:[%s0] sm:$0xf]
  %v16 = vld [vmem:[%s0 + $0x4] sm:$0xf]
  %v17 = vld [vmem:[%s0 + $0x8] sm:$0xf]
  %v18 = vld [vmem:[%s0 + $0xc] sm:$0xf]
  %v19 = vld [vmem:[%s0 + $0x10] sm:$0xf]
  %v20 = vld [vmem:[%s0 + $0x14] sm:$0xf]
  %v21 = vld [vmem:[%s0 + $0x18] sm:$0xf]
  %v22 = vld [vmem:[%s0 + $0x1c] sm:$0xf]
  %v23 = vld [vmem:[%s0 + $0x20] sm:$0xf]
  %v24 = vld [vmem:[%s0 + $0x24] sm:$0xf]
  %v25 = vld [vmem:[%s0 + $0x28] sm:$0xf]
  %v26 = vld [vmem:[%s0 + $0x2c] sm:$0xf]
  %v27 = vld [vmem:[%s0 + $0x30] sm:$0xf]
  %v28 = vld [vmem:[%s0 + $0x34] sm:$0xf]
  %v29 = vld [vmem:[%s0 + $0x38] sm:$0xf]
  %v30 = vld [vmem:[%s0 + $0x3c] sm:$0xf]
  %v31 = vld [vmem:[%s0 + $0x40] sm:$0xf]
  %v32 = vld [vmem:[%s0 + $0x44] sm:$0xf]
  %v33 = vld [vmem:[%s0 + $0x48] sm:$0xf]
  %v34 = vld [vmem:[%s0 + $0x4c] sm:$0xf]
  %v35 = vld [vmem:[%s0 + $0x50] sm:$0xf]
  %v36 = vld [vmem:[%s0 + $0x54] sm:$0xf]
  %v37 = vld [vmem:[%s0 + $0x58] sm:$0xf]
  %v38 = vld [vmem:[%s0 + $0x5c] sm:$0xf]
  %v39 = vld [vmem:[%s0 + $0x60] sm:$0xf]
  %v40 = vld [vmem:[%s0 + $0x64] sm:$0xf]
  %v41 = vld [vmem:[%s0 + $0x68] sm:$0xf]
  %v42 = vld [vmem:[%s0 + $0x6c] sm:$0xf]
  %v43 = vld [vmem:[%s0 + $0x70] sm:$0xf]
  %v44 = vld [vmem:[%s0 + $0x74] sm:$0xf]
  %v45 = vld [vmem:[%s0 + $0x78] sm:$0xf]
  %v46 = vld [vmem:[%s0 + $0x7c] sm:$0xf]
  %v47 = vld [vmem:[%s0 + $0x80] sm:$0xf]
  %v48 = vld [vmem:[%s0 + $0x84] sm:$0xf]
  %v49 = vld [vmem:[%s0 + $0x88] sm:$0xf]
  %v50 = vld [vmem:[%s0 + $0x8c] sm:$0xf]
  %v51 = vld [vmem:[%s0 + $0x90] sm:$0xf]
  %v52 = vld [vmem:[%s0 + $0x94] sm:$0xf]
  %v53 = vld [vmem:[%s0 + $0x98] sm:$0xf]
  %v54 = vld [vmem:[%s0 + $0x9c] sm:$0xf]
  %v55 = vld [vmem:[%s0 + $0xa0] sm:$0xf]
  %v56 = vld [vmem:[%s0 + $0xa4] sm:$0xf]
  %v57 = vld [vmem:[%s0 + $0xa8] sm:$0xf]
  %v58 = vld [vmem:[%s0 + $0xac] sm:$0xf]
  %v59 = vld [vmem:[%s0 + $0xb0] sm:$0xf]
  %v60 = vld [vmem:[%s0 + $0xb4] sm:$0xf]
  %v61 = vld [vmem:[%s0 + $0xb8] sm:$0xf]
  %v62 = vld [vmem:[%s0 + $0xbc] sm:$0xf]
  %v63 = vld [vmem:[%s0 + $0xc0] sm:$0xf]
  %v64 = vld [vmem:[%s0 + $0xc4] sm:$0xf]
  %v65 = vld [vmem:[%s0 + $0xc8] sm:$0xf]
  %v66 = vld [vmem:[%s0 + $0xcc] sm:$0xf]
  %v67 = vld [vmem:[%s0 + $0xd0] sm:$0xf]
  %v68 = vld [vmem:[%s0 + $0xd4] sm:$0xf]
  %v69 = vld [vmem:[%s0 + $0xd8] sm:$0xf]
  %v70 = vld [vmem:[%s0 + $0xdc] sm:$0xf]
  %v71 = vld [vmem:[%s0 + $0xe0] sm:$0xf]
  %v72 = vld [vmem:[%s0 + $0xe4] sm:$0xf]
  %v73 = vld [vmem:[%s0 + $0xe8] sm:$0xf]
  %v74 = vld [vmem:[%s0 + $0xec] sm:$0xf]
  %v75 = vld [vmem:[%s0 + $0xf0] sm:$0xf]
  %v76 = vld [vmem:[%s0 + $0xf4] sm:$0xf]
  %v77 = vld [vmem:[%s0 + $0xf8] sm:$0xf]
  %v78 = vld [vmem:[%s0 + $0xfc] sm:$0xf]
  %v79 = vld [vmem:[%s0 + $0x100] sm:$0xf]
  %v80 = vld [vmem:[%s0 + $0x104] sm:$0xf]
  %v81 = vld [vmem:[%s0 + $0x108] sm:$0xf]
  %v82 = vld [vmem:[%s0 + $0x10c] sm:$0xf]
  %v83 = vld [vmem:[%s0 + $0x110] sm:$0xf]
  %v84 = vld [vmem:[%s0 + $0x114] sm:$0xf]
  %v85 = vld [vmem:[%s0 + $0x118] sm:$0xf]
  %v86 = vld [vmem:[%s0 + $0x11c] sm:$0xf]
  %v87 = vld [vmem:[%s0 + $0x120] sm:$0xf]
  %v88 = vld [vmem:[%s0 + $0x124] sm:$0xf]
  %v89 = vld [vmem:[%s0 + $0x128] sm:$0xf]
  %v90 = vld [vmem:[%s0 + $0x12c] sm:$0xf]
  %v91 = vld [vmem:[%s0 + $0x130] sm:$0xf]
  %v92 = vld [vmem:[%s0 + $0x134] sm:$0xf]
  %v93 = vld [vmem:[%s0 + $0x138] sm:$0xf]
  %v94 = vld [vmem:[%s0 + $0x13c] sm:$0xf]
  %v95 = vld [vmem:[%s0 + $0x140] sm:$0xf]
  %v96 = vld [vmem:[%s0 + $0x144] sm:$0xf]
  %v97 = vld [vmem:[%s0 + $0x148] sm:$0xf]
  %v98 = vld [vmem:[%s0 + $0x14c] sm:$0xf]
  %v99 = vld [vmem:[%s0 + $0x150] sm:$0xf]
  %v100 = vld [vmem:[%s0 + $0x154] sm:$0xf]
  %v101 = vld [vmem:[%s0 + $0x158] sm:$0xf]
  %v102 = vld [vmem:[%s0 + $0x15c] sm:$0xf]
  %v103 = vld [vmem:[%s0 + $0x160] sm:$0xf]
  %v104 = vld [vmem:[%s0 + $0x164] sm:$0xf]
  %v105 = vld [vmem:[%s0 + $0x168] sm:$0xf]
  %v106 = vld [vmem:[%s0 + $0x16c] sm:$0xf]
  %v107 = vld [vmem:[%s0 + $0x170] sm:$0xf]
  %v108 = vld [vmem:[%s0 + $0x174] sm:$0xf]
  %v109 = vld [vmem:[%s0 + $0x178] sm:$0xf]
  %v110 = vld [vmem:[%s0 + $0x17c] sm:$0xf]
  %v111 = vld [vmem:[%s0 + $0x180] sm:$0xf]
  %v112 = vld [vmem:[%s0 + $0x184] sm:$0xf]
  %v113 = vld [vmem:[%s0 + $0x188] sm:$0xf]
  %v114 = vld [vmem:[%s0 + $0x18c] sm:$0xf]
  %v115 = vld [vmem:[%s0 + $0x190] sm:$0xf]
  %v116 = vld [vmem:[%s0 + $0x194] sm:$0xf]
  %v117 = vld [vmem:[%s0 + $0x198] sm:$0xf]
  %v118 = vld [vmem:[%s0 + $0x19c] sm:$0xf]
  %v119 = vld [vmem:[%s0 + $0x1a0] sm:$0xf]
  %v120 = vld [vmem:[%s0 + $0x1a4] sm:$0xf]
  %v121 = vld [vmem:[%s0 + $0x1a8] sm:$0xf]
  %v122 = vld [vmem:[%s0 + $0x1ac] sm:$0xf]
  %v123 = vld [vmem:[%s0 + $0x1b0] sm:$0xf]
  %v124 = vld [vmem:[%s0 + $0x1b4] sm:$0xf]
  %v125 = vld [vmem:[%s0 + $0x1b8] sm:$0xf]
  %v126 = vld [vmem:[%s0 + $0x1bc] sm:$0xf]
  %v127 = vld [vmem:[%s0 + $0x1c0] sm:$0xf]
  %v128 = vld [vmem:[%s0 + $0x1c4] sm:$0xf]
  %v129 = vld [vmem:[%s0 + $0x1c8] sm:$0xf]
  %v130 = vld [vmem:[%s0 + $0x1cc] sm:$0xf]
  %v131 = vld [vmem:[%s0 + $0x1d0] sm:$0xf]
  %v132 = vld [vmem:[%s0 + $0x1d4] sm:$0xf]
  %v133 = vld [vmem:[%s0 + $0x1d8] sm:$0xf]
  %v134 = vld [vmem:[%s0 + $0x1dc] sm:$0xf]
  %v135 = vld [vmem:[%s0 + $0x1e0] sm:$0xf]
  %v136 = vld [vmem:[%s0 + $0x1e4] sm:$0xf]
  %v137 = vld [vmem:[%s0 + $0x1e8] sm:$0xf]
  %v138 = vld [vmem:[%s0 + $0x1ec] sm:$0xf]
  %v139 = vld [vmem:[%s0 + $0x1f0] sm:$0xf]
  %v140 = vld [vmem:[%s0 + $0x1f4] sm:$0xf]
  %v141 = vld [vmem:[%s0 + $0x1f8] sm:$0xf]
  %v142 = vld [vmem:[%s0 + $0x1fc] sm:$0xf]
  %v143 = vld [vmem:[%s1] sm:$0x3]
  %v144 = vld [vmem:[%s2] sm:$0x1]
  %v146 = vperm.slane %v144, 0
  %v276 = vunpack.c.l.b16 %v15
  %v277 = vunpack.c.l.b16 %v16
  %v278 = vunpack.c.l.b16 %v17
  %v279 = vunpack.c.l.b16 %v18
  %v280 = vunpack.c.l.b16 %v19
  %v281 = vunpack.c.l.b16 %v20
  %v282 = vunpack.c.l.b16 %v21
  %v283 = vunpack.c.l.b16 %v22
  %v284 = vunpack.c.l.b16 %v23
  %v285 = vunpack.c.l.b16 %v24
  %v286 = vunpack.c.l.b16 %v25
  %v287 = vunpack.c.l.b16 %v26
  %v288 = vunpack.c.l.b16 %v27
  %v289 = vunpack.c.l.b16 %v28
  %v290 = vunpack.c.l.b16 %v29
  %v291 = vunpack.c.l.b16 %v30
  %v292 = vunpack.c.l.b16 %v31
  %v293 = vunpack.c.l.b16 %v32
  %v294 = vunpack.c.l.b16 %v33
  %v295 = vunpack.c.l.b16 %v34
  %v296 = vunpack.c.l.b16 %v35
  %v297 = vunpack.c.l.b16 %v36
  %v298 = vunpack.c.l.b16 %v37
  %v299 = vunpack.c.l.b16 %v38
  %v300 = vunpack.c.l.b16 %v39
  %v301 = vunpack.c.l.b16 %v40
  %v302 = vunpack.c.l.b16 %v41
  %v303 = vunpack.c.l.b16 %v42
  %v304 = vunpack.c.l.b16 %v43
  %v305 = vunpack.c.l.b16 %v44
  %v306 = vunpack.c.l.b16 %v45
  %v307 = vunpack.c.l.b16 %v46
  %v308 = vunpack.c.l.b16 %v47
  %v309 = vunpack.c.l.b16 %v48
  %v310 = vunpack.c.l.b16 %v49
  %v311 = vunpack.c.l.b16 %v50
  %v312 = vunpack.c.l.b16 %v51
  %v313 = vunpack.c.l.b16 %v52
  %v314 = vunpack.c.l.b16 %v53
  %v315 = vunpack.c.l.b16 %v54
  %v316 = vunpack.c.l.b16 %v55
  %v317 = vunpack.c.l.b16 %v56
  %v318 = vunpack.c.l.b16 %v57
  %v319 = vunpack.c.l.b16 %v58
  %v320 = vunpack.c.l.b16 %v59
  %v321 = vunpack.c.l.b16 %v60
  %v322 = vunpack.c.l.b16 %v61
  %v323 = vunpack.c.l.b16 %v62
  %v324 = vunpack.c.l.b16 %v63
  %v325 = vunpack.c.l.b16 %v64
  %v326 = vunpack.c.l.b16 %v65
  %v327 = vunpack.c.l.b16 %v66
  %v328 = vunpack.c.l.b16 %v67
  %v329 = vunpack.c.l.b16 %v68
  %v330 = vunpack.c.l.b16 %v69
  %v331 = vunpack.c.l.b16 %v70
  %v332 = vunpack.c.l.b16 %v71
  %v333 = vunpack.c.l.b16 %v72
  %v334 = vunpack.c.l.b16 %v73
  %v335 = vunpack.c.l.b16 %v74
  %v336 = vunpack.c.l.b16 %v75
  %v337 = vunpack.c.l.b16 %v76
  %v338 = vunpack.c.l.b16 %v77
  %v339 = vunpack.c.l.b16 %v78
  %v340 = vunpack.c.l.b16 %v79
  %v341 = vunpack.c.l.b16 %v80
  %v342 = vunpack.c.l.b16 %v81
  %v343 = vunpack.c.l.b16 %v82
  %v344 = vunpack.c.l.b16 %v83
  %v345 = vunpack.c.l.b16 %v84
  %v346 = vunpack.c.l.b16 %v85
  %v347 = vunpack.c.l.b16 %v86
  %v348 = vunpack.c.l.b16 %v87
  %v349 = vunpack.c.l.b16 %v88
  %v350 = vunpack.c.l.b16 %v89
  %v351 = vunpack.c.l.b16 %v90
  %v352 = vunpack.c.l.b16 %v91
  %v353 = vunpack.c.l.b16 %v92
  %v354 = vunpack.c.l.b16 %v93
  %v355 = vunpack.c.l.b16 %v94
  %v356 = vunpack.c.l.b16 %v95
  %v357 = vunpack.c.l.b16 %v96
  %v358 = vunpack.c.l.b16 %v97
  %v359 = vunpack.c.l.b16 %v98
  %v360 = vunpack.c.l.b16 %v99
  %v361 = vunpack.c.l.b16 %v100
  %v362 = vunpack.c.l.b16 %v101
  %v363 = vunpack.c.l.b16 %v102
  %v364 = vunpack.c.l.b16 %v103
  %v365 = vunpack.c.l.b16 %v104
  %v366 = vunpack.c.l.b16 %v105
  %v367 = vunpack.c.l.b16 %v106
  %v368 = vunpack.c.l.b16 %v107
  %v369 = vunpack.c.l.b16 %v108
  %v370 = vunpack.c.l.b16 %v109
  %v371 = vunpack.c.l.b16 %v110
  %v372 = vunpack.c.l.b16 %v111
  %v373 = vunpack.c.l.b16 %v112
  %v374 = vunpack.c.l.b16 %v113
  %v375 = vunpack.c.l.b16 %v114
  %v376 = vunpack.c.l.b16 %v115
  %v377 = vunpack.c.l.b16 %v116
  %v378 = vunpack.c.l.b16 %v117
  %v379 = vunpack.c.l.b16 %v118
  %v380 = vunpack.c.l.b16 %v119
  %v381 = vunpack.c.l.b16 %v120
  %v382 = vunpack.c.l.b16 %v121
  %v383 = vunpack.c.l.b16 %v122
  %v384 = vunpack.c.l.b16 %v123
  %v385 = vunpack.c.l.b16 %v124
  %v386 = vunpack.c.l.b16 %v125
  %v387 = vunpack.c.l.b16 %v126
  %v388 = vunpack.c.l.b16 %v127
  %v389 = vunpack.c.l.b16 %v128
  %v390 = vunpack.c.l.b16 %v129
  %v391 = vunpack.c.l.b16 %v130
  %v392 = vunpack.c.l.b16 %v131
  %v393 = vunpack.c.l.b16 %v132
  %v394 = vunpack.c.l.b16 %v133
  %v395 = vunpack.c.l.b16 %v134
  %v396 = vunpack.c.l.b16 %v135
  %v397 = vunpack.c.l.b16 %v136
  %v398 = vunpack.c.l.b16 %v137
  %v399 = vunpack.c.l.b16 %v138
  %v400 = vunpack.c.l.b16 %v139
  %v401 = vunpack.c.l.b16 %v140
  %v402 = vunpack.c.l.b16 %v141
  %v403 = vunpack.c.l.b16 %v142
  %v404 = vpack.c.b16 %v277, %v276
  %v405 = vpack.c.b16 %v279, %v278
  %v406 = vpack.c.b16 %v281, %v280
  %v407 = vpack.c.b16 %v283, %v282
  %v408 = vpack.c.b16 %v285, %v284
  %v409 = vpack.c.b16 %v287, %v286
  %v410 = vpack.c.b16 %v289, %v288
  %v411 = vpack.c.b16 %v291, %v290
  %v412 = vpack.c.b16 %v293, %v292
  %v413 = vpack.c.b16 %v295, %v294
  %v414 = vpack.c.b16 %v297, %v296
  %v415 = vpack.c.b16 %v299, %v298
  %v416 = vpack.c.b16 %v301, %v300
  %v417 = vpack.c.b16 %v303, %v302
  %v418 = vpack.c.b16 %v305, %v304
  %v419 = vpack.c.b16 %v307, %v306
  %v420 = vpack.c.b16 %v309, %v308
  %v421 = vpack.c.b16 %v311, %v310
  %v422 = vpack.c.b16 %v313, %v312
  %v423 = vpack.c.b16 %v315, %v314
  %v424 = vpack.c.b16 %v317, %v316
  %v425 = vpack.c.b16 %v319, %v318
  %v426 = vpack.c.b16 %v321, %v320
  %v427 = vpack.c.b16 %v323, %v322
  %v428 = vpack.c.b16 %v325, %v324
  %v429 = vpack.c.b16 %v327, %v326
  %v430 = vpack.c.b16 %v329, %v328
  %v431 = vpack.c.b16 %v331, %v330
  %v432 = vpack.c.b16 %v333, %v332
  %v433 = vpack.c.b16 %v335, %v334
  %v434 = vpack.c.b16 %v337, %v336
  %v435 = vpack.c.b16 %v339, %v338
  %v436 = vpack.c.b16 %v341, %v340
  %v437 = vpack.c.b16 %v343, %v342
  %v438 = vpack.c.b16 %v345, %v344
  %v439 = vpack.c.b16 %v347, %v346
  %v440 = vpack.c.b16 %v349, %v348
  %v441 = vpack.c.b16 %v351, %v350
  %v442 = vpack.c.b16 %v353, %v352
  %v443 = vpack.c.b16 %v355, %v354
  %v444 = vpack.c.b16 %v357, %v356
  %v445 = vpack.c.b16 %v359, %v358
  %v446 = vpack.c.b16 %v361, %v360
  %v447 = vpack.c.b16 %v363, %v362
  %v448 = vpack.c.b16 %v365, %v364
  %v449 = vpack.c.b16 %v367, %v366
  %v450 = vpack.c.b16 %v369, %v368
  %v451 = vpack.c.b16 %v371, %v370
  %v452 = vpack.c.b16 %v373, %v372
  %v453 = vpack.c.b16 %v375, %v374
  %v454 = vpack.c.b16 %v377, %v376
  %v455 = vpack.c.b16 %v379, %v378
  %v456 = vpack.c.b16 %v381, %v380
  %v457 = vpack.c.b16 %v383, %v382
  %v458 = vpack.c.b16 %v385, %v384
  %v459 = vpack.c.b16 %v387, %v386
  %v460 = vpack.c.b16 %v389, %v388
  %v461 = vpack.c.b16 %v391, %v390
  %v462 = vpack.c.b16 %v393, %v392
  %v463 = vpack.c.b16 %v395, %v394
  %v464 = vpack.c.b16 %v397, %v396
  %v465 = vpack.c.b16 %v399, %v398
  %v466 = vpack.c.b16 %v401, %v400
  %v467 = vpack.c.b16 %v403, %v402
  %vm468 = vcmask 23552
  %v470 = vsel %vm468, %v404, 0
  %v473 = vsel %vm468, %v405, 0
  %v476 = vsel %vm468, %v406, 0
  %v479 = vsel %vm468, %v407, 0
  %v482 = vsel %vm468, %v408, 0
  %v485 = vsel %vm468, %v409, 0
  %v488 = vsel %vm468, %v410, 0
  %v491 = vsel %vm468, %v411, 0
  %v494 = vsel %vm468, %v412, 0
  %v497 = vsel %vm468, %v413, 0
  %v500 = vsel %vm468, %v414, 0
  %v503 = vsel %vm468, %v415, 0
  %v506 = vsel %vm468, %v416, 0
  %v509 = vsel %vm468, %v417, 0
  %v512 = vsel %vm468, %v418, 0
  %v515 = vsel %vm468, %v419, 0
  %v518 = vsel %vm468, %v420, 0
  %v521 = vsel %vm468, %v421, 0
  %v524 = vsel %vm468, %v422, 0
  %v527 = vsel %vm468, %v423, 0
  %v530 = vsel %vm468, %v424, 0
  %v533 = vsel %vm468, %v425, 0
  %v536 = vsel %vm468, %v426, 0
  %v539 = vsel %vm468, %v427, 0
  %v542 = vsel %vm468, %v428, 0
  %v545 = vsel %vm468, %v429, 0
  %v548 = vsel %vm468, %v430, 0
  %v551 = vsel %vm468, %v431, 0
  %v554 = vsel %vm468, %v432, 0
  %v557 = vsel %vm468, %v433, 0
  %v560 = vsel %vm468, %v434, 0
  %v563 = vsel %vm468, %v435, 0
  %v566 = vsel %vm468, %v436, 0
  %v569 = vsel %vm468, %v437, 0
  %v572 = vsel %vm468, %v438, 0
  %v575 = vsel %vm468, %v439, 0
  %v578 = vsel %vm468, %v440, 0
  %v581 = vsel %vm468, %v441, 0
  %v584 = vsel %vm468, %v442, 0
  %v587 = vsel %vm468, %v443, 0
  %v590 = vsel %vm468, %v444, 0
  %v593 = vsel %vm468, %v445, 0
  %v596 = vsel %vm468, %v446, 0
  %v599 = vsel %vm468, %v447, 0
  %v602 = vsel %vm468, %v448, 0
  %v605 = vsel %vm468, %v449, 0
  %v608 = vsel %vm468, %v450, 0
  %v611 = vsel %vm468, %v451, 0
  %v614 = vsel %vm468, %v452, 0
  %v617 = vsel %vm468, %v453, 0
  %v620 = vsel %vm468, %v454, 0
  %v623 = vsel %vm468, %v455, 0
  %v626 = vsel %vm468, %v456, 0
  %v629 = vsel %vm468, %v457, 0
  %v632 = vsel %vm468, %v458, 0
  %v635 = vsel %vm468, %v459, 0
  %v638 = vsel %vm468, %v460, 0
  %v641 = vsel %vm468, %v461, 0
  %v644 = vsel %vm468, %v462, 0
  %v647 = vsel %vm468, %v463, 0
  %v650 = vsel %vm468, %v464, 0
  %v653 = vsel %vm468, %v465, 0
  %v656 = vsel %vm468, %v466, 0
  %v659 = vsel %vm468, %v467, 0
  %vm661 = vcmask 1040384
  %vm662 = vcmask 1041408
  %v663 = vsel %vm661, 4294967295, 65535
  %v664 = vsel %vm662, %v663, 0
  %v666 = vand.u32 %v143, %v664
  %668 = vmatpush.bf16.msra.mxu0 0
  %669 = vmatpush.bf16.msra.mxu0 0
  %670 = vmatpush.bf16.msra.mxu0 0
  %671 = vmatpush.bf16.msra.mxu0 0
  %672 = vmatpush.bf16.msra.mxu0 0
  %673 = vmatpush.bf16.msra.mxu0 0
  %674 = vmatpush.bf16.msra.mxu0 0
  %675 = vmatpush.bf16.msra.mxu0 %v666
  %676 = vmatmul.bf16.gmra.mxu0 %v470
  %v677 = vpop.f32.mrf.mxu0
  %v678 = vadd.f32 %v146, %v677
  %v679 = vpop.f32.mrf.mxu0
  %v680 = vadd.f32 %v146, %v679
  %681 = vmatmul.bf16.gmra.mxu0 %v473
  %v682 = vpop.f32.mrf.mxu0
  %v683 = vadd.f32 %v146, %v682
  %v684 = vpop.f32.mrf.mxu0
  %v685 = vadd.f32 %v146, %v684
  %686 = vmatmul.bf16.gmra.mxu0 %v476
  %v687 = vpop.f32.mrf.mxu0
  %v688 = vadd.f32 %v146, %v687
  %v689 = vpop.f32.mrf.mxu0
  %v690 = vadd.f32 %v146, %v689
  %691 = vmatmul.bf16.gmra.mxu0 %v479
  %v692 = vpop.f32.mrf.mxu0
  %v693 = vadd.f32 %v146, %v692
  %v694 = vpop.f32.mrf.mxu0
  %v695 = vadd.f32 %v146, %v694
  %696 = vmatmul.bf16.gmra.mxu0 %v482
  %v697 = vpop.f32.mrf.mxu0
  %v698 = vadd.f32 %v146, %v697
  %v699 = vpop.f32.mrf.mxu0
  %v700 = vadd.f32 %v146, %v699
  %701 = vmatmul.bf16.gmra.mxu0 %v485
  %v702 = vpop.f32.mrf.mxu0
  %v703 = vadd.f32 %v146, %v702
  %v704 = vpop.f32.mrf.mxu0
  %v705 = vadd.f32 %v146, %v704
  %706 = vmatmul.bf16.gmra.mxu0 %v488
  %v707 = vpop.f32.mrf.mxu0
  %v708 = vadd.f32 %v146, %v707
  %v709 = vpop.f32.mrf.mxu0
  %v710 = vadd.f32 %v146, %v709
  %711 = vmatmul.bf16.gmra.mxu0 %v491
  %v712 = vpop.f32.mrf.mxu0
  %v713 = vadd.f32 %v146, %v712
  %v714 = vpop.f32.mrf.mxu0
  %v715 = vadd.f32 %v146, %v714
  %716 = vmatmul.bf16.gmra.mxu0 %v494
  %v717 = vpop.f32.mrf.mxu0
  %v718 = vadd.f32 %v146, %v717
  %v719 = vpop.f32.mrf.mxu0
  %v720 = vadd.f32 %v146, %v719
  %721 = vmatmul.bf16.gmra.mxu0 %v497
  %v722 = vpop.f32.mrf.mxu0
  %v723 = vadd.f32 %v146, %v722
  %v724 = vpop.f32.mrf.mxu0
  %v725 = vadd.f32 %v146, %v724
  %726 = vmatmul.bf16.gmra.mxu0 %v500
  %v727 = vpop.f32.mrf.mxu0
  %v728 = vadd.f32 %v146, %v727
  %v729 = vpop.f32.mrf.mxu0
  %v730 = vadd.f32 %v146, %v729
  %731 = vmatmul.bf16.gmra.mxu0 %v503
  %v732 = vpop.f32.mrf.mxu0
  %v733 = vadd.f32 %v146, %v732
  %v734 = vpop.f32.mrf.mxu0
  %v735 = vadd.f32 %v146, %v734
  %736 = vmatmul.bf16.gmra.mxu0 %v506
  %v737 = vpop.f32.mrf.mxu0
  %v738 = vadd.f32 %v146, %v737
  %v739 = vpop.f32.mrf.mxu0
  %v740 = vadd.f32 %v146, %v739
  %741 = vmatmul.bf16.gmra.mxu0 %v509
  %v742 = vpop.f32.mrf.mxu0
  %v743 = vadd.f32 %v146, %v742
  %v744 = vpop.f32.mrf.mxu0
  %v745 = vadd.f32 %v146, %v744
  %746 = vmatmul.bf16.gmra.mxu0 %v512
  %v747 = vpop.f32.mrf.mxu0
  %v748 = vadd.f32 %v146, %v747
  %v749 = vpop.f32.mrf.mxu0
  %v750 = vadd.f32 %v146, %v749
  %751 = vmatmul.bf16.gmra.mxu0 %v515
  %v752 = vpop.f32.mrf.mxu0
  %v753 = vadd.f32 %v146, %v752
  %v754 = vpop.f32.mrf.mxu0
  %v755 = vadd.f32 %v146, %v754
  %756 = vmatmul.bf16.gmra.mxu0 %v518
  %v757 = vpop.f32.mrf.mxu0
  %v758 = vadd.f32 %v146, %v757
  %v759 = vpop.f32.mrf.mxu0
  %v760 = vadd.f32 %v146, %v759
  %761 = vmatmul.bf16.gmra.mxu0 %v521
  %v762 = vpop.f32.mrf.mxu0
  %v763 = vadd.f32 %v146, %v762
  %v764 = vpop.f32.mrf.mxu0
  %v765 = vadd.f32 %v146, %v764
  %766 = vmatmul.bf16.gmra.mxu0 %v524
  %v767 = vpop.f32.mrf.mxu0
  %v768 = vadd.f32 %v146, %v767
  %v769 = vpop.f32.mrf.mxu0
  %v770 = vadd.f32 %v146, %v769
  %771 = vmatmul.bf16.gmra.mxu0 %v527
  %v772 = vpop.f32.mrf.mxu0
  %v773 = vadd.f32 %v146, %v772
  %v774 = vpop.f32.mrf.mxu0
  %v775 = vadd.f32 %v146, %v774
  %776 = vmatmul.bf16.gmra.mxu0 %v530
  %v777 = vpop.f32.mrf.mxu0
  %v778 = vadd.f32 %v146, %v777
  %v779 = vpop.f32.mrf.mxu0
  %v780 = vadd.f32 %v146, %v779
  %781 = vmatmul.bf16.gmra.mxu0 %v533
  %v782 = vpop.f32.mrf.mxu0
  %v783 = vadd.f32 %v146, %v782
  %v784 = vpop.f32.mrf.mxu0
  %v785 = vadd.f32 %v146, %v784
  %786 = vmatmul.bf16.gmra.mxu0 %v536
  %v787 = vpop.f32.mrf.mxu0
  %v788 = vadd.f32 %v146, %v787
  %v789 = vpop.f32.mrf.mxu0
  %v790 = vadd.f32 %v146, %v789
  %791 = vmatmul.bf16.gmra.mxu0 %v539
  %v792 = vpop.f32.mrf.mxu0
  %v793 = vadd.f32 %v146, %v792
  %v794 = vpop.f32.mrf.mxu0
  %v795 = vadd.f32 %v146, %v794
  %796 = vmatmul.bf16.gmra.mxu0 %v542
  %v797 = vpop.f32.mrf.mxu0
  %v798 = vadd.f32 %v146, %v797
  %v799 = vpop.f32.mrf.mxu0
  %v800 = vadd.f32 %v146, %v799
  %801 = vmatmul.bf16.gmra.mxu0 %v545
  %v802 = vpop.f32.mrf.mxu0
  %v803 = vadd.f32 %v146, %v802
  %v804 = vpop.f32.mrf.mxu0
  %v805 = vadd.f32 %v146, %v804
  %806 = vmatmul.bf16.gmra.mxu0 %v548
  %v807 = vpop.f32.mrf.mxu0
  %v808 = vadd.f32 %v146, %v807
  %v809 = vpop.f32.mrf.mxu0
  %v810 = vadd.f32 %v146, %v809
  %811 = vmatmul.bf16.gmra.mxu0 %v551
  %v812 = vpop.f32.mrf.mxu0
  %v813 = vadd.f32 %v146, %v812
  %v814 = vpop.f32.mrf.mxu0
  %v815 = vadd.f32 %v146, %v814
  %816 = vmatmul.bf16.gmra.mxu0 %v554
  %v817 = vpop.f32.mrf.mxu0
  %v818 = vadd.f32 %v146, %v817
  %v819 = vpop.f32.mrf.mxu0
  %v820 = vadd.f32 %v146, %v819
  %821 = vmatmul.bf16.gmra.mxu0 %v557
  %v822 = vpop.f32.mrf.mxu0
  %v823 = vadd.f32 %v146, %v822
  %v824 = vpop.f32.mrf.mxu0
  %v825 = vadd.f32 %v146, %v824
  %826 = vmatmul.bf16.gmra.mxu0 %v560
  %v827 = vpop.f32.mrf.mxu0
  %v828 = vadd.f32 %v146, %v827
  %v829 = vpop.f32.mrf.mxu0
  %v830 = vadd.f32 %v146, %v829
  %831 = vmatmul.bf16.gmra.mxu0 %v563
  %v832 = vpop.f32.mrf.mxu0
  %v833 = vadd.f32 %v146, %v832
  %v834 = vpop.f32.mrf.mxu0
  %v835 = vadd.f32 %v146, %v834
  %836 = vmatmul.bf16.gmra.mxu0 %v566
  %v837 = vpop.f32.mrf.mxu0
  %v838 = vadd.f32 %v146, %v837
  %v839 = vpop.f32.mrf.mxu0
  %v840 = vadd.f32 %v146, %v839
  %841 = vmatmul.bf16.gmra.mxu0 %v569
  %v842 = vpop.f32.mrf.mxu0
  %v843 = vadd.f32 %v146, %v842
  %v844 = vpop.f32.mrf.mxu0
  %v845 = vadd.f32 %v146, %v844
  %846 = vmatmul.bf16.gmra.mxu0 %v572
  %v847 = vpop.f32.mrf.mxu0
  %v848 = vadd.f32 %v146, %v847
  %v849 = vpop.f32.mrf.mxu0
  %v850 = vadd.f32 %v146, %v849
  %851 = vmatmul.bf16.gmra.mxu0 %v575
  %v852 = vpop.f32.mrf.mxu0
  %v853 = vadd.f32 %v146, %v852
  %v854 = vpop.f32.mrf.mxu0
  %v855 = vadd.f32 %v146, %v854
  %856 = vmatmul.bf16.gmra.mxu0 %v578
  %v857 = vpop.f32.mrf.mxu0
  %v858 = vadd.f32 %v146, %v857
  %v859 = vpop.f32.mrf.mxu0
  %v860 = vadd.f32 %v146, %v859
  %861 = vmatmul.bf16.gmra.mxu0 %v581
  %v862 = vpop.f32.mrf.mxu0
  %v863 = vadd.f32 %v146, %v862
  %v864 = vpop.f32.mrf.mxu0
  %v865 = vadd.f32 %v146, %v864
  %866 = vmatmul.bf16.gmra.mxu0 %v584
  %v867 = vpop.f32.mrf.mxu0
  %v868 = vadd.f32 %v146, %v867
  %v869 = vpop.f32.mrf.mxu0
  %v870 = vadd.f32 %v146, %v869
  %871 = vmatmul.bf16.gmra.mxu0 %v587
  %v872 = vpop.f32.mrf.mxu0
  %v873 = vadd.f32 %v146, %v872
  %v874 = vpop.f32.mrf.mxu0
  %v875 = vadd.f32 %v146, %v874
  %876 = vmatmul.bf16.gmra.mxu0 %v590
  %v877 = vpop.f32.mrf.mxu0
  %v878 = vadd.f32 %v146, %v877
  %v879 = vpop.f32.mrf.mxu0
  %v880 = vadd.f32 %v146, %v879
  %881 = vmatmul.bf16.gmra.mxu0 %v593
  %v882 = vpop.f32.mrf.mxu0
  %v883 = vadd.f32 %v146, %v882
  %v884 = vpop.f32.mrf.mxu0
  %v885 = vadd.f32 %v146, %v884
  %886 = vmatmul.bf16.gmra.mxu0 %v596
  %v887 = vpop.f32.mrf.mxu0
  %v888 = vadd.f32 %v146, %v887
  %v889 = vpop.f32.mrf.mxu0
  %v890 = vadd.f32 %v146, %v889
  %891 = vmatmul.bf16.gmra.mxu0 %v599
  %v892 = vpop.f32.mrf.mxu0
  %v893 = vadd.f32 %v146, %v892
  %v894 = vpop.f32.mrf.mxu0
  %v895 = vadd.f32 %v146, %v894
  %896 = vmatmul.bf16.gmra.mxu0 %v602
  %v897 = vpop.f32.mrf.mxu0
  %v898 = vadd.f32 %v146, %v897
  %v899 = vpop.f32.mrf.mxu0
  %v900 = vadd.f32 %v146, %v899
  %901 = vmatmul.bf16.gmra.mxu0 %v605
  %v902 = vpop.f32.mrf.mxu0
  %v903 = vadd.f32 %v146, %v902
  %v904 = vpop.f32.mrf.mxu0
  %v905 = vadd.f32 %v146, %v904
  %906 = vmatmul.bf16.gmra.mxu0 %v608
  %v907 = vpop.f32.mrf.mxu0
  %v908 = vadd.f32 %v146, %v907
  %v909 = vpop.f32.mrf.mxu0
  %v910 = vadd.f32 %v146, %v909
  %911 = vmatmul.bf16.gmra.mxu0 %v611
  %v912 = vpop.f32.mrf.mxu0
  %v913 = vadd.f32 %v146, %v912
  %v914 = vpop.f32.mrf.mxu0
  %v915 = vadd.f32 %v146, %v914
  %916 = vmatmul.bf16.gmra.mxu0 %v614
  %v917 = vpop.f32.mrf.mxu0
  %v918 = vadd.f32 %v146, %v917
  %v919 = vpop.f32.mrf.mxu0
  %v920 = vadd.f32 %v146, %v919
  %921 = vmatmul.bf16.gmra.mxu0 %v617
  %v922 = vpop.f32.mrf.mxu0
  %v923 = vadd.f32 %v146, %v922
  %v924 = vpop.f32.mrf.mxu0
  %v925 = vadd.f32 %v146, %v924
  %926 = vmatmul.bf16.gmra.mxu0 %v620
  %v927 = vpop.f32.mrf.mxu0
  %v928 = vadd.f32 %v146, %v927
  %v929 = vpop.f32.mrf.mxu0
  %v930 = vadd.f32 %v146, %v929
  %931 = vmatmul.bf16.gmra.mxu0 %v623
  %v932 = vpop.f32.mrf.mxu0
  %v933 = vadd.f32 %v146, %v932
  %v934 = vpop.f32.mrf.mxu0
  %v935 = vadd.f32 %v146, %v934
  %936 = vmatmul.bf16.gmra.mxu0 %v626
  %v937 = vpop.f32.mrf.mxu0
  %v938 = vadd.f32 %v146, %v937
  %v939 = vpop.f32.mrf.mxu0
  %v940 = vadd.f32 %v146, %v939
  %941 = vmatmul.bf16.gmra.mxu0 %v629
  %v942 = vpop.f32.mrf.mxu0
  %v943 = vadd.f32 %v146, %v942
  %v944 = vpop.f32.mrf.mxu0
  %v945 = vadd.f32 %v146, %v944
  %946 = vmatmul.bf16.gmra.mxu0 %v632
  %v947 = vpop.f32.mrf.mxu0
  %v948 = vadd.f32 %v146, %v947
  %v949 = vpop.f32.mrf.mxu0
  %v950 = vadd.f32 %v146, %v949
  %951 = vmatmul.bf16.gmra.mxu0 %v635
  %v952 = vpop.f32.mrf.mxu0
  %v953 = vadd.f32 %v146, %v952
  %v954 = vpop.f32.mrf.mxu0
  %v955 = vadd.f32 %v146, %v954
  %956 = vmatmul.bf16.gmra.mxu0 %v638
  %v957 = vpop.f32.mrf.mxu0
  %v958 = vadd.f32 %v146, %v957
  %v959 = vpop.f32.mrf.mxu0
  %v960 = vadd.f32 %v146, %v959
  %961 = vmatmul.bf16.gmra.mxu0 %v641
  %v962 = vpop.f32.mrf.mxu0
  %v963 = vadd.f32 %v146, %v962
  %v964 = vpop.f32.mrf.mxu0
  %v965 = vadd.f32 %v146, %v964
  %966 = vmatmul.bf16.gmra.mxu0 %v644
  %v967 = vpop.f32.mrf.mxu0
  %v968 = vadd.f32 %v146, %v967
  %v969 = vpop.f32.mrf.mxu0
  %v970 = vadd.f32 %v146, %v969
  %971 = vmatmul.bf16.gmra.mxu0 %v647
  %v972 = vpop.f32.mrf.mxu0
  %v973 = vadd.f32 %v146, %v972
  %v974 = vpop.f32.mrf.mxu0
  %v975 = vadd.f32 %v146, %v974
  %976 = vmatmul.bf16.gmra.mxu0 %v650
  %v977 = vpop.f32.mrf.mxu0
  %v978 = vadd.f32 %v146, %v977
  %v979 = vpop.f32.mrf.mxu0
  %v980 = vadd.f32 %v146, %v979
  %981 = vmatmul.bf16.gmra.mxu0 %v653
  %v982 = vpop.f32.mrf.mxu0
  %v983 = vadd.f32 %v146, %v982
  %v984 = vpop.f32.mrf.mxu0
  %v985 = vadd.f32 %v146, %v984
  %986 = vmatmul.bf16.gmra.mxu0 %v656
  %v987 = vpop.f32.mrf.mxu0
  %v988 = vadd.f32 %v146, %v987
  %v989 = vpop.f32.mrf.mxu0
  %v990 = vadd.f32 %v146, %v989
  %991 = vmatmul.bf16.gmra.mxu0 %v659
  %v992 = vpop.f32.mrf.mxu0
  %v993 = vadd.f32 %v146, %v992
  %v994 = vpop.f32.mrf.mxu0
  %v995 = vadd.f32 %v146, %v994
  %996 = vdwg.mxu0
  %v997 = vmax.f32 %v678, 0.0
  %v998 = vmax.f32 %v680, 0.0
  %v999 = vmax.f32 %v683, 0.0
  %v1000 = vmax.f32 %v685, 0.0
  %v1001 = vmax.f32 %v688, 0.0
  %v1002 = vmax.f32 %v690, 0.0
  %v1003 = vmax.f32 %v693, 0.0
  %v1004 = vmax.f32 %v695, 0.0
  %v1005 = vmax.f32 %v698, 0.0
  %v1006 = vmax.f32 %v700, 0.0
  %v1007 = vmax.f32 %v703, 0.0
  %v1008 = vmax.f32 %v705, 0.0
  %v1009 = vmax.f32 %v708, 0.0
  %v1010 = vmax.f32 %v710, 0.0
  %v1011 = vmax.f32 %v713, 0.0
  %v1012 = vmax.f32 %v715, 0.0
  %v1013 = vmax.f32 %v718, 0.0
  %v1014 = vmax.f32 %v720, 0.0
  %v1015 = vmax.f32 %v723, 0.0
  %v1016 = vmax.f32 %v725, 0.0
  %v1017 = vmax.f32 %v728, 0.0
  %v1018 = vmax.f32 %v730, 0.0
  %v1019 = vmax.f32 %v733, 0.0
  %v1020 = vmax.f32 %v735, 0.0
  %v1021 = vmax.f32 %v738, 0.0
  %v1022 = vmax.f32 %v740, 0.0
  %v1023 = vmax.f32 %v743, 0.0
  %v1024 = vmax.f32 %v745, 0.0
  %v1025 = vmax.f32 %v748, 0.0
  %v1026 = vmax.f32 %v750, 0.0
  %v1027 = vmax.f32 %v753, 0.0
  %v1028 = vmax.f32 %v755, 0.0
  %v1029 = vmax.f32 %v758, 0.0
  %v1030 = vmax.f32 %v760, 0.0
  %v1031 = vmax.f32 %v763, 0.0
  %v1032 = vmax.f32 %v765, 0.0
  %v1033 = vmax.f32 %v768, 0.0
  %v1034 = vmax.f32 %v770, 0.0
  %v1035 = vmax.f32 %v773, 0.0
  %v1036 = vmax.f32 %v775, 0.0
  %v1037 = vmax.f32 %v778, 0.0
  %v1038 = vmax.f32 %v780, 0.0
  %v1039 = vmax.f32 %v783, 0.0
  %v1040 = vmax.f32 %v785, 0.0
  %v1041 = vmax.f32 %v788, 0.0
  %v1042 = vmax.f32 %v790, 0.0
  %v1043 = vmax.f32 %v793, 0.0
  %v1044 = vmax.f32 %v795, 0.0
  %v1045 = vmax.f32 %v798, 0.0
  %v1046 = vmax.f32 %v800, 0.0
  %v1047 = vmax.f32 %v803, 0.0
  %v1048 = vmax.f32 %v805, 0.0
  %v1049 = vmax.f32 %v808, 0.0
  %v1050 = vmax.f32 %v810, 0.0
  %v1051 = vmax.f32 %v813, 0.0
  %v1052 = vmax.f32 %v815, 0.0
  %v1053 = vmax.f32 %v818, 0.0
  %v1054 = vmax.f32 %v820, 0.0
  %v1055 = vmax.f32 %v823, 0.0
  %v1056 = vmax.f32 %v825, 0.0
  %v1057 = vmax.f32 %v828, 0.0
  %v1058 = vmax.f32 %v830, 0.0
  %v1059 = vmax.f32 %v833, 0.0
  %v1060 = vmax.f32 %v835, 0.0
  %v1061 = vmax.f32 %v838, 0.0
  %v1062 = vmax.f32 %v840, 0.0
  %v1063 = vmax.f32 %v843, 0.0
  %v1064 = vmax.f32 %v845, 0.0
  %v1065 = vmax.f32 %v848, 0.0
  %v1066 = vmax.f32 %v850, 0.0
  %v1067 = vmax.f32 %v853, 0.0
  %v1068 = vmax.f32 %v855, 0.0
  %v1069 = vmax.f32 %v858, 0.0
  %v1070 = vmax.f32 %v860, 0.0
  %v1071 = vmax.f32 %v863, 0.0
  %v1072 = vmax.f32 %v865, 0.0
  %v1073 = vmax.f32 %v868, 0.0
  %v1074 = vmax.f32 %v870, 0.0
  %v1075 = vmax.f32 %v873, 0.0
  %v1076 = vmax.f32 %v875, 0.0
  %v1077 = vmax.f32 %v878, 0.0
  %v1078 = vmax.f32 %v880, 0.0
  %v1079 = vmax.f32 %v883, 0.0
  %v1080 = vmax.f32 %v885, 0.0
  %v1081 = vmax.f32 %v888, 0.0
  %v1082 = vmax.f32 %v890, 0.0
  %v1083 = vmax.f32 %v893, 0.0
  %v1084 = vmax.f32 %v895, 0.0
  %v1085 = vmax.f32 %v898, 0.0
  %v1086 = vmax.f32 %v900, 0.0
  %v1087 = vmax.f32 %v903, 0.0
  %v1088 = vmax.f32 %v905, 0.0
  %v1089 = vmax.f32 %v908, 0.0
  %v1090 = vmax.f32 %v910, 0.0
  %v1091 = vmax.f32 %v913, 0.0
  %v1092 = vmax.f32 %v915, 0.0
  %v1093 = vmax.f32 %v918, 0.0
  %v1094 = vmax.f32 %v920, 0.0
  %v1095 = vmax.f32 %v923, 0.0
  %v1096 = vmax.f32 %v925, 0.0
  %v1097 = vmax.f32 %v928, 0.0
  %v1098 = vmax.f32 %v930, 0.0
  %v1099 = vmax.f32 %v933, 0.0
  %v1100 = vmax.f32 %v935, 0.0
  %v1101 = vmax.f32 %v938, 0.0
  %v1102 = vmax.f32 %v940, 0.0
  %v1103 = vmax.f32 %v943, 0.0
  %v1104 = vmax.f32 %v945, 0.0
  %v1105 = vmax.f32 %v948, 0.0
  %v1106 = vmax.f32 %v950, 0.0
  %v1107 = vmax.f32 %v953, 0.0
  %v1108 = vmax.f32 %v955, 0.0
  %v1109 = vmax.f32 %v958, 0.0
  %v1110 = vmax.f32 %v960, 0.0
  %v1111 = vmax.f32 %v963, 0.0
  %v1112 = vmax.f32 %v965, 0.0
  %v1113 = vmax.f32 %v968, 0.0
  %v1114 = vmax.f32 %v970, 0.0
  %v1115 = vmax.f32 %v973, 0.0
  %v1116 = vmax.f32 %v975, 0.0
  %v1117 = vmax.f32 %v978, 0.0
  %v1118 = vmax.f32 %v980, 0.0
  %v1119 = vmax.f32 %v983, 0.0
  %v1120 = vmax.f32 %v985, 0.0
  %v1121 = vmax.f32 %v988, 0.0
  %v1122 = vmax.f32 %v990, 0.0
  %v1123 = vmax.f32 %v993, 0.0
  %v1124 = vmax.f32 %v995, 0.0
  %v1125 = vmin.f32 %v997, 6.0
  %v1126 = vmin.f32 %v998, 6.0
  %v1127 = vmin.f32 %v999, 6.0
  %v1128 = vmin.f32 %v1000, 6.0
  %v1129 = vmin.f32 %v1001, 6.0
  %v1130 = vmin.f32 %v1002, 6.0
  %v1131 = vmin.f32 %v1003, 6.0
  %v1132 = vmin.f32 %v1004, 6.0
  %v1133 = vmin.f32 %v1005, 6.0
  %v1134 = vmin.f32 %v1006, 6.0
  %v1135 = vmin.f32 %v1007, 6.0
  %v1136 = vmin.f32 %v1008, 6.0
  %v1137 = vmin.f32 %v1009, 6.0
  %v1138 = vmin.f32 %v1010, 6.0
  %v1139 = vmin.f32 %v1011, 6.0
  %v1140 = vmin.f32 %v1012, 6.0
  %v1141 = vmin.f32 %v1013, 6.0
  %v1142 = vmin.f32 %v1014, 6.0
  %v1143 = vmin.f32 %v1015, 6.0
  %v1144 = vmin.f32 %v1016, 6.0
  %v1145 = vmin.f32 %v1017, 6.0
  %v1146 = vmin.f32 %v1018, 6.0
  %v1147 = vmin.f32 %v1019, 6.0
  %v1148 = vmin.f32 %v1020, 6.0
  %v1149 = vmin.f32 %v1021, 6.0
  %v1150 = vmin.f32 %v1022, 6.0
  %v1151 = vmin.f32 %v1023, 6.0
  %v1152 = vmin.f32 %v1024, 6.0
  %v1153 = vmin.f32 %v1025, 6.0
  %v1154 = vmin.f32 %v1026, 6.0
  %v1155 = vmin.f32 %v1027, 6.0
  %v1156 = vmin.f32 %v1028, 6.0
  %v1157 = vmin.f32 %v1029, 6.0
  %v1158 = vmin.f32 %v1030, 6.0
  %v1159 = vmin.f32 %v1031, 6.0
  %v1160 = vmin.f32 %v1032, 6.0
  %v1161 = vmin.f32 %v1033, 6.0
  %v1162 = vmin.f32 %v1034, 6.0
  %v1163 = vmin.f32 %v1035, 6.0
  %v1164 = vmin.f32 %v1036, 6.0
  %v1165 = vmin.f32 %v1037, 6.0
  %v1166 = vmin.f32 %v1038, 6.0
  %v1167 = vmin.f32 %v1039, 6.0
  %v1168 = vmin.f32 %v1040, 6.0
  %v1169 = vmin.f32 %v1041, 6.0
  %v1170 = vmin.f32 %v1042, 6.0
  %v1171 = vmin.f32 %v1043, 6.0
  %v1172 = vmin.f32 %v1044, 6.0
  %v1173 = vmin.f32 %v1045, 6.0
  %v1174 = vmin.f32 %v1046, 6.0
  %v1175 = vmin.f32 %v1047, 6.0
  %v1176 = vmin.f32 %v1048, 6.0
  %v1177 = vmin.f32 %v1049, 6.0
  %v1178 = vmin.f32 %v1050, 6.0
  %v1179 = vmin.f32 %v1051, 6.0
  %v1180 = vmin.f32 %v1052, 6.0
  %v1181 = vmin.f32 %v1053, 6.0
  %v1182 = vmin.f32 %v1054, 6.0
  %v1183 = vmin.f32 %v1055, 6.0
  %v1184 = vmin.f32 %v1056, 6.0
  %v1185 = vmin.f32 %v1057, 6.0
  %v1186 = vmin.f32 %v1058, 6.0
  %v1187 = vmin.f32 %v1059, 6.0
  %v1188 = vmin.f32 %v1060, 6.0
  %v1189 = vmin.f32 %v1061, 6.0
  %v1190 = vmin.f32 %v1062, 6.0
  %v1191 = vmin.f32 %v1063, 6.0
  %v1192 = vmin.f32 %v1064, 6.0
  %v1193 = vmin.f32 %v1065, 6.0
  %v1194 = vmin.f32 %v1066, 6.0
  %v1195 = vmin.f32 %v1067, 6.0
  %v1196 = vmin.f32 %v1068, 6.0
  %v1197 = vmin.f32 %v1069, 6.0
  %v1198 = vmin.f32 %v1070, 6.0
  %v1199 = vmin.f32 %v1071, 6.0
  %v1200 = vmin.f32 %v1072, 6.0
  %v1201 = vmin.f32 %v1073, 6.0
  %v1202 = vmin.f32 %v1074, 6.0
  %v1203 = vmin.f32 %v1075, 6.0
  %v1204 = vmin.f32 %v1076, 6.0
  %v1205 = vmin.f32 %v1077, 6.0
  %v1206 = vmin.f32 %v1078, 6.0
  %v1207 = vmin.f32 %v1079, 6.0
  %v1208 = vmin.f32 %v1080, 6.0
  %v1209 = vmin.f32 %v1081, 6.0
  %v1210 = vmin.f32 %v1082, 6.0
  %v1211 = vmin.f32 %v1083, 6.0
  %v1212 = vmin.f32 %v1084, 6.0
  %v1213 = vmin.f32 %v1085, 6.0
  %v1214 = vmin.f32 %v1086, 6.0
  %v1215 = vmin.f32 %v1087, 6.0
  %v1216 = vmin.f32 %v1088, 6.0
  %v1217 = vmin.f32 %v1089, 6.0
  %v1218 = vmin.f32 %v1090, 6.0
  %v1219 = vmin.f32 %v1091, 6.0
  %v1220 = vmin.f32 %v1092, 6.0
  %v1221 = vmin.f32 %v1093, 6.0
  %v1222 = vmin.f32 %v1094, 6.0
  %v1223 = vmin.f32 %v1095, 6.0
  %v1224 = vmin.f32 %v1096, 6.0
  %v1225 = vmin.f32 %v1097, 6.0
  %v1226 = vmin.f32 %v1098, 6.0
  %v1227 = vmin.f32 %v1099, 6.0
  %v1228 = vmin.f32 %v1100, 6.0
  %v1229 = vmin.f32 %v1101, 6.0
  %v1230 = vmin.f32 %v1102, 6.0
  %v1231 = vmin.f32 %v1103, 6.0
  %v1232 = vmin.f32 %v1104, 6.0
  %v1233 = vmin.f32 %v1105, 6.0
  %v1234 = vmin.f32 %v1106, 6.0
  %v1235 = vmin.f32 %v1107, 6.0
  %v1236 = vmin.f32 %v1108, 6.0
  %v1237 = vmin.f32 %v1109, 6.0
  %v1238 = vmin.f32 %v1110, 6.0
  %v1239 = vmin.f32 %v1111, 6.0
  %v1240 = vmin.f32 %v1112, 6.0
  %v1241 = vmin.f32 %v1113, 6.0
  %v1242 = vmin.f32 %v1114, 6.0
  %v1243 = vmin.f32 %v1115, 6.0
  %v1244 = vmin.f32 %v1116, 6.0
  %v1245 = vmin.f32 %v1117, 6.0
  %v1246 = vmin.f32 %v1118, 6.0
  %v1247 = vmin.f32 %v1119, 6.0
  %v1248 = vmin.f32 %v1120, 6.0
  %v1249 = vmin.f32 %v1121, 6.0
  %v1250 = vmin.f32 %v1122, 6.0
  %v1251 = vmin.f32 %v1123, 6.0
  %v1252 = vmin.f32 %v1124, 6.0
  %v1253 = vpack.c.bf16 %v1125, %v1125
  %v1254 = vpack.c.bf16 %v1126, %v1126
  %v1255 = vpack.c.bf16 %v1127, %v1127
  %v1256 = vpack.c.bf16 %v1128, %v1128
  %v1257 = vpack.c.bf16 %v1129, %v1129
  %v1258 = vpack.c.bf16 %v1130, %v1130
  %v1259 = vpack.c.bf16 %v1131, %v1131
  %v1260 = vpack.c.bf16 %v1132, %v1132
  %v1261 = vpack.c.bf16 %v1133, %v1133
  %v1262 = vpack.c.bf16 %v1134, %v1134
  %v1263 = vpack.c.bf16 %v1135, %v1135
  %v1264 = vpack.c.bf16 %v1136, %v1136
  %v1265 = vpack.c.bf16 %v1137, %v1137
  %v1266 = vpack.c.bf16 %v1138, %v1138
  %v1267 = vpack.c.bf16 %v1139, %v1139
  %v1268 = vpack.c.bf16 %v1140, %v1140
  %v1269 = vpack.c.bf16 %v1141, %v1141
  %v1270 = vpack.c.bf16 %v1142, %v1142
  %v1271 = vpack.c.bf16 %v1143, %v1143
  %v1272 = vpack.c.bf16 %v1144, %v1144
  %v1273 = vpack.c.bf16 %v1145, %v1145
  %v1274 = vpack.c.bf16 %v1146, %v1146
  %v1275 = vpack.c.bf16 %v1147, %v1147
  %v1276 = vpack.c.bf16 %v1148, %v1148
  %v1277 = vpack.c.bf16 %v1149, %v1149
  %v1278 = vpack.c.bf16 %v1150, %v1150
  %v1279 = vpack.c.bf16 %v1151, %v1151
  %v1280 = vpack.c.bf16 %v1152, %v1152
  %v1281 = vpack.c.bf16 %v1153, %v1153
  %v1282 = vpack.c.bf16 %v1154, %v1154
  %v1283 = vpack.c.bf16 %v1155, %v1155
  %v1284 = vpack.c.bf16 %v1156, %v1156
  %v1285 = vpack.c.bf16 %v1157, %v1157
  %v1286 = vpack.c.bf16 %v1158, %v1158
  %v1287 = vpack.c.bf16 %v1159, %v1159
  %v1288 = vpack.c.bf16 %v1160, %v1160
  %v1289 = vpack.c.bf16 %v1161, %v1161
  %v1290 = vpack.c.bf16 %v1162, %v1162
  %v1291 = vpack.c.bf16 %v1163, %v1163
  %v1292 = vpack.c.bf16 %v1164, %v1164
  %v1293 = vpack.c.bf16 %v1165, %v1165
  %v1294 = vpack.c.bf16 %v1166, %v1166
  %v1295 = vpack.c.bf16 %v1167, %v1167
  %v1296 = vpack.c.bf16 %v1168, %v1168
  %v1297 = vpack.c.bf16 %v1169, %v1169
  %v1298 = vpack.c.bf16 %v1170, %v1170
  %v1299 = vpack.c.bf16 %v1171, %v1171
  %v1300 = vpack.c.bf16 %v1172, %v1172
  %v1301 = vpack.c.bf16 %v1173, %v1173
  %v1302 = vpack.c.bf16 %v1174, %v1174
  %v1303 = vpack.c.bf16 %v1175, %v1175
  %v1304 = vpack.c.bf16 %v1176, %v1176
  %v1305 = vpack.c.bf16 %v1177, %v1177
  %v1306 = vpack.c.bf16 %v1178, %v1178
  %v1307 = vpack.c.bf16 %v1179, %v1179
  %v1308 = vpack.c.bf16 %v1180, %v1180
  %v1309 = vpack.c.bf16 %v1181, %v1181
  %v1310 = vpack.c.bf16 %v1182, %v1182
  %v1311 = vpack.c.bf16 %v1183, %v1183
  %v1312 = vpack.c.bf16 %v1184, %v1184
  %v1313 = vpack.c.bf16 %v1185, %v1185
  %v1314 = vpack.c.bf16 %v1186, %v1186
  %v1315 = vpack.c.bf16 %v1187, %v1187
  %v1316 = vpack.c.bf16 %v1188, %v1188
  %v1317 = vpack.c.bf16 %v1189, %v1189
  %v1318 = vpack.c.bf16 %v1190, %v1190
  %v1319 = vpack.c.bf16 %v1191, %v1191
  %v1320 = vpack.c.bf16 %v1192, %v1192
  %v1321 = vpack.c.bf16 %v1193, %v1193
  %v1322 = vpack.c.bf16 %v1194, %v1194
  %v1323 = vpack.c.bf16 %v1195, %v1195
  %v1324 = vpack.c.bf16 %v1196, %v1196
  %v1325 = vpack.c.bf16 %v1197, %v1197
  %v1326 = vpack.c.bf16 %v1198, %v1198
  %v1327 = vpack.c.bf16 %v1199, %v1199
  %v1328 = vpack.c.bf16 %v1200, %v1200
  %v1329 = vpack.c.bf16 %v1201, %v1201
  %v1330 = vpack.c.bf16 %v1202, %v1202
  %v1331 = vpack.c.bf16 %v1203, %v1203
  %v1332 = vpack.c.bf16 %v1204, %v1204
  %v1333 = vpack.c.bf16 %v1205, %v1205
  %v1334 = vpack.c.bf16 %v1206, %v1206
  %v1335 = vpack.c.bf16 %v1207, %v1207
  %v1336 = vpack.c.bf16 %v1208, %v1208
  %v1337 = vpack.c.bf16 %v1209, %v1209
  %v1338 = vpack.c.bf16 %v1210, %v1210
  %v1339 = vpack.c.bf16 %v1211, %v1211
  %v1340 = vpack.c.bf16 %v1212, %v1212
  %v1341 = vpack.c.bf16 %v1213, %v1213
  %v1342 = vpack.c.bf16 %v1214, %v1214
  %v1343 = vpack.c.bf16 %v1215, %v1215
  %v1344 = vpack.c.bf16 %v1216, %v1216
  %v1345 = vpack.c.bf16 %v1217, %v1217
  %v1346 = vpack.c.bf16 %v1218, %v1218
  %v1347 = vpack.c.bf16 %v1219, %v1219
  %v1348 = vpack.c.bf16 %v1220, %v1220
  %v1349 = vpack.c.bf16 %v1221, %v1221
  %v1350 = vpack.c.bf16 %v1222, %v1222
  %v1351 = vpack.c.bf16 %v1223, %v1223
  %v1352 = vpack.c.bf16 %v1224, %v1224
  %v1353 = vpack.c.bf16 %v1225, %v1225
  %v1354 = vpack.c.bf16 %v1226, %v1226
  %v1355 = vpack.c.bf16 %v1227, %v1227
  %v1356 = vpack.c.bf16 %v1228, %v1228
  %v1357 = vpack.c.bf16 %v1229, %v1229
  %v1358 = vpack.c.bf16 %v1230, %v1230
  %v1359 = vpack.c.bf16 %v1231, %v1231
  %v1360 = vpack.c.bf16 %v1232, %v1232
  %v1361 = vpack.c.bf16 %v1233, %v1233
  %v1362 = vpack.c.bf16 %v1234, %v1234
  %v1363 = vpack.c.bf16 %v1235, %v1235
  %v1364 = vpack.c.bf16 %v1236, %v1236
  %v1365 = vpack.c.bf16 %v1237, %v1237
  %v1366 = vpack.c.bf16 %v1238, %v1238
  %v1367 = vpack.c.bf16 %v1239, %v1239
  %v1368 = vpack.c.bf16 %v1240, %v1240
  %v1369 = vpack.c.bf16 %v1241, %v1241
  %v1370 = vpack.c.bf16 %v1242, %v1242
  %v1371 = vpack.c.bf16 %v1243, %v1243
  %v1372 = vpack.c.bf16 %v1244, %v1244
  %v1373 = vpack.c.bf16 %v1245, %v1245
  %v1374 = vpack.c.bf16 %v1246, %v1246
  %v1375 = vpack.c.bf16 %v1247, %v1247
  %v1376 = vpack.c.bf16 %v1248, %v1248
  %v1377 = vpack.c.bf16 %v1249, %v1249
  %v1378 = vpack.c.bf16 %v1250, %v1250
  %v1379 = vpack.c.bf16 %v1251, %v1251
  %v1380 = vpack.c.bf16 %v1252, %v1252
  %vm1381 = vcmask 68608
  %1382 = vst.msk [vmem:[%s3] sm:$0xf] %vm1381, %v1253
  %1383 = vst.msk [vmem:[%s3 + $0x4] sm:$0xf] %vm1381, %v1254
  %1384 = vst.msk [vmem:[%s3 + $0x8] sm:$0xf] %vm1381, %v1255
  %1385 = vst.msk [vmem:[%s3 + $0xc] sm:$0xf] %vm1381, %v1256
  %1386 = vst.msk [vmem:[%s3 + $0x10] sm:$0xf] %vm1381, %v1257
  %1387 = vst.msk [vmem:[%s3 + $0x14] sm:$0xf] %vm1381, %v1258
  %1388 = vst.msk [vmem:[%s3 + $0x18] sm:$0xf] %vm1381, %v1259
  %1389 = vst.msk [vmem:[%s3 + $0x1c] sm:$0xf] %vm1381, %v1260
  %1390 = vst.msk [vmem:[%s3 + $0x20] sm:$0xf] %vm1381, %v1261
  %1391 = vst.msk [vmem:[%s3 + $0x24] sm:$0xf] %vm1381, %v1262
  %1392 = vst.msk [vmem:[%s3 + $0x28] sm:$0xf] %vm1381, %v1263
  %1393 = vst.msk [vmem:[%s3 + $0x2c] sm:$0xf] %vm1381, %v1264
  %1394 = vst.msk [vmem:[%s3 + $0x30] sm:$0xf] %vm1381, %v1265
  %1395 = vst.msk [vmem:[%s3 + $0x34] sm:$0xf] %vm1381, %v1266
  %1396 = vst.msk [vmem:[%s3 + $0x38] sm:$0xf] %vm1381, %v1267
  %1397 = vst.msk [vmem:[%s3 + $0x3c] sm:$0xf] %vm1381, %v1268
  %1398 = vst.msk [vmem:[%s3 + $0x40] sm:$0xf] %vm1381, %v1269
  %1399 = vst.msk [vmem:[%s3 + $0x44] sm:$0xf] %vm1381, %v1270
  %1400 = vst.msk [vmem:[%s3 + $0x48] sm:$0xf] %vm1381, %v1271
  %1401 = vst.msk [vmem:[%s3 + $0x4c] sm:$0xf] %vm1381, %v1272
  %1402 = vst.msk [vmem:[%s3 + $0x50] sm:$0xf] %vm1381, %v1273
  %1403 = vst.msk [vmem:[%s3 + $0x54] sm:$0xf] %vm1381, %v1274
  %1404 = vst.msk [vmem:[%s3 + $0x58] sm:$0xf] %vm1381, %v1275
  %1405 = vst.msk [vmem:[%s3 + $0x5c] sm:$0xf] %vm1381, %v1276
  %1406 = vst.msk [vmem:[%s3 + $0x60] sm:$0xf] %vm1381, %v1277
  %1407 = vst.msk [vmem:[%s3 + $0x64] sm:$0xf] %vm1381, %v1278
  %1408 = vst.msk [vmem:[%s3 + $0x68] sm:$0xf] %vm1381, %v1279
  %1409 = vst.msk [vmem:[%s3 + $0x6c] sm:$0xf] %vm1381, %v1280
  %1410 = vst.msk [vmem:[%s3 + $0x70] sm:$0xf] %vm1381, %v1281
  %1411 = vst.msk [vmem:[%s3 + $0x74] sm:$0xf] %vm1381, %v1282
  %1412 = vst.msk [vmem:[%s3 + $0x78] sm:$0xf] %vm1381, %v1283
  %1413 = vst.msk [vmem:[%s3 + $0x7c] sm:$0xf] %vm1381, %v1284
  %1414 = vst.msk [vmem:[%s3 + $0x80] sm:$0xf] %vm1381, %v1285
  %1415 = vst.msk [vmem:[%s3 + $0x84] sm:$0xf] %vm1381, %v1286
  %1416 = vst.msk [vmem:[%s3 + $0x88] sm:$0xf] %vm1381, %v1287
  %1417 = vst.msk [vmem:[%s3 + $0x8c] sm:$0xf] %vm1381, %v1288
  %1418 = vst.msk [vmem:[%s3 + $0x90] sm:$0xf] %vm1381, %v1289
  %1419 = vst.msk [vmem:[%s3 + $0x94] sm:$0xf] %vm1381, %v1290
  %1420 = vst.msk [vmem:[%s3 + $0x98] sm:$0xf] %vm1381, %v1291
  %1421 = vst.msk [vmem:[%s3 + $0x9c] sm:$0xf] %vm1381, %v1292
  %1422 = vst.msk [vmem:[%s3 + $0xa0] sm:$0xf] %vm1381, %v1293
  %1423 = vst.msk [vmem:[%s3 + $0xa4] sm:$0xf] %vm1381, %v1294
  %1424 = vst.msk [vmem:[%s3 + $0xa8] sm:$0xf] %vm1381, %v1295
  %1425 = vst.msk [vmem:[%s3 + $0xac] sm:$0xf] %vm1381, %v1296
  %1426 = vst.msk [vmem:[%s3 + $0xb0] sm:$0xf] %vm1381, %v1297
  %1427 = vst.msk [vmem:[%s3 + $0xb4] sm:$0xf] %vm1381, %v1298
  %1428 = vst.msk [vmem:[%s3 + $0xb8] sm:$0xf] %vm1381, %v1299
  %1429 = vst.msk [vmem:[%s3 + $0xbc] sm:$0xf] %vm1381, %v1300
  %1430 = vst.msk [vmem:[%s3 + $0xc0] sm:$0xf] %vm1381, %v1301
  %1431 = vst.msk [vmem:[%s3 + $0xc4] sm:$0xf] %vm1381, %v1302
  %1432 = vst.msk [vmem:[%s3 + $0xc8] sm:$0xf] %vm1381, %v1303
  %1433 = vst.msk [vmem:[%s3 + $0xcc] sm:$0xf] %vm1381, %v1304
  %1434 = vst.msk [vmem:[%s3 + $0xd0] sm:$0xf] %vm1381, %v1305
  %1435 = vst.msk [vmem:[%s3 + $0xd4] sm:$0xf] %vm1381, %v1306
  %1436 = vst.msk [vmem:[%s3 + $0xd8] sm:$0xf] %vm1381, %v1307
  %1437 = vst.msk [vmem:[%s3 + $0xdc] sm:$0xf] %vm1381, %v1308
  %1438 = vst.msk [vmem:[%s3 + $0xe0] sm:$0xf] %vm1381, %v1309
  %1439 = vst.msk [vmem:[%s3 + $0xe4] sm:$0xf] %vm1381, %v1310
  %1440 = vst.msk [vmem:[%s3 + $0xe8] sm:$0xf] %vm1381, %v1311
  %1441 = vst.msk [vmem:[%s3 + $0xec] sm:$0xf] %vm1381, %v1312
  %1442 = vst.msk [vmem:[%s3 + $0xf0] sm:$0xf] %vm1381, %v1313
  %1443 = vst.msk [vmem:[%s3 + $0xf4] sm:$0xf] %vm1381, %v1314
  %1444 = vst.msk [vmem:[%s3 + $0xf8] sm:$0xf] %vm1381, %v1315
  %1445 = vst.msk [vmem:[%s3 + $0xfc] sm:$0xf] %vm1381, %v1316
  %1446 = vst.msk [vmem:[%s3 + $0x100] sm:$0xf] %vm1381, %v1317
  %1447 = vst.msk [vmem:[%s3 + $0x104] sm:$0xf] %vm1381, %v1318
  %1448 = vst.msk [vmem:[%s3 + $0x108] sm:$0xf] %vm1381, %v1319
  %1449 = vst.msk [vmem:[%s3 + $0x10c] sm:$0xf] %vm1381, %v1320
  %1450 = vst.msk [vmem:[%s3 + $0x110] sm:$0xf] %vm1381, %v1321
  %1451 = vst.msk [vmem:[%s3 + $0x114] sm:$0xf] %vm1381, %v1322
  %1452 = vst.msk [vmem:[%s3 + $0x118] sm:$0xf] %vm1381, %v1323
  %1453 = vst.msk [vmem:[%s3 + $0x11c] sm:$0xf] %vm1381, %v1324
  %1454 = vst.msk [vmem:[%s3 + $0x120] sm:$0xf] %vm1381, %v1325
  %1455 = vst.msk [vmem:[%s3 + $0x124] sm:$0xf] %vm1381, %v1326
  %1456 = vst.msk [vmem:[%s3 + $0x128] sm:$0xf] %vm1381, %v1327
  %1457 = vst.msk [vmem:[%s3 + $0x12c] sm:$0xf] %vm1381, %v1328
  %1458 = vst.msk [vmem:[%s3 + $0x130] sm:$0xf] %vm1381, %v1329
  %1459 = vst.msk [vmem:[%s3 + $0x134] sm:$0xf] %vm1381, %v1330
  %1460 = vst.msk [vmem:[%s3 + $0x138] sm:$0xf] %vm1381, %v1331
  %1461 = vst.msk [vmem:[%s3 + $0x13c] sm:$0xf] %vm1381, %v1332
  %1462 = vst.msk [vmem:[%s3 + $0x140] sm:$0xf] %vm1381, %v1333
  %1463 = vst.msk [vmem:[%s3 + $0x144] sm:$0xf] %vm1381, %v1334
  %1464 = vst.msk [vmem:[%s3 + $0x148] sm:$0xf] %vm1381, %v1335
  %1465 = vst.msk [vmem:[%s3 + $0x14c] sm:$0xf] %vm1381, %v1336
  %1466 = vst.msk [vmem:[%s3 + $0x150] sm:$0xf] %vm1381, %v1337
  %1467 = vst.msk [vmem:[%s3 + $0x154] sm:$0xf] %vm1381, %v1338
  %1468 = vst.msk [vmem:[%s3 + $0x158] sm:$0xf] %vm1381, %v1339
  %1469 = vst.msk [vmem:[%s3 + $0x15c] sm:$0xf] %vm1381, %v1340
  %1470 = vst.msk [vmem:[%s3 + $0x160] sm:$0xf] %vm1381, %v1341
  %1471 = vst.msk [vmem:[%s3 + $0x164] sm:$0xf] %vm1381, %v1342
  %1472 = vst.msk [vmem:[%s3 + $0x168] sm:$0xf] %vm1381, %v1343
  %1473 = vst.msk [vmem:[%s3 + $0x16c] sm:$0xf] %vm1381, %v1344
  %1474 = vst.msk [vmem:[%s3 + $0x170] sm:$0xf] %vm1381, %v1345
  %1475 = vst.msk [vmem:[%s3 + $0x174] sm:$0xf] %vm1381, %v1346
  %1476 = vst.msk [vmem:[%s3 + $0x178] sm:$0xf] %vm1381, %v1347
  %1477 = vst.msk [vmem:[%s3 + $0x17c] sm:$0xf] %vm1381, %v1348
  %1478 = vst.msk [vmem:[%s3 + $0x180] sm:$0xf] %vm1381, %v1349
  %1479 = vst.msk [vmem:[%s3 + $0x184] sm:$0xf] %vm1381, %v1350
  %1480 = vst.msk [vmem:[%s3 + $0x188] sm:$0xf] %vm1381, %v1351
  %1481 = vst.msk [vmem:[%s3 + $0x18c] sm:$0xf] %vm1381, %v1352
  %1482 = vst.msk [vmem:[%s3 + $0x190] sm:$0xf] %vm1381, %v1353
  %1483 = vst.msk [vmem:[%s3 + $0x194] sm:$0xf] %vm1381, %v1354
  %1484 = vst.msk [vmem:[%s3 + $0x198] sm:$0xf] %vm1381, %v1355
  %1485 = vst.msk [vmem:[%s3 + $0x19c] sm:$0xf] %vm1381, %v1356
  %1486 = vst.msk [vmem:[%s3 + $0x1a0] sm:$0xf] %vm1381, %v1357
  %1487 = vst.msk [vmem:[%s3 + $0x1a4] sm:$0xf] %vm1381, %v1358
  %1488 = vst.msk [vmem:[%s3 + $0x1a8] sm:$0xf] %vm1381, %v1359
  %1489 = vst.msk [vmem:[%s3 + $0x1ac] sm:$0xf] %vm1381, %v1360
  %1490 = vst.msk [vmem:[%s3 + $0x1b0] sm:$0xf] %vm1381, %v1361
  %1491 = vst.msk [vmem:[%s3 + $0x1b4] sm:$0xf] %vm1381, %v1362
  %1492 = vst.msk [vmem:[%s3 + $0x1b8] sm:$0xf] %vm1381, %v1363
  %1493 = vst.msk [vmem:[%s3 + $0x1bc] sm:$0xf] %vm1381, %v1364
  %1494 = vst.msk [vmem:[%s3 + $0x1c0] sm:$0xf] %vm1381, %v1365
  %1495 = vst.msk [vmem:[%s3 + $0x1c4] sm:$0xf] %vm1381, %v1366
  %1496 = vst.msk [vmem:[%s3 + $0x1c8] sm:$0xf] %vm1381, %v1367
  %1497 = vst.msk [vmem:[%s3 + $0x1cc] sm:$0xf] %vm1381, %v1368
  %1498 = vst.msk [vmem:[%s3 + $0x1d0] sm:$0xf] %vm1381, %v1369
  %1499 = vst.msk [vmem:[%s3 + $0x1d4] sm:$0xf] %vm1381, %v1370
  %1500 = vst.msk [vmem:[%s3 + $0x1d8] sm:$0xf] %vm1381, %v1371
  %1501 = vst.msk [vmem:[%s3 + $0x1dc] sm:$0xf] %vm1381, %v1372
  %1502 = vst.msk [vmem:[%s3 + $0x1e0] sm:$0xf] %vm1381, %v1373
  %1503 = vst.msk [vmem:[%s3 + $0x1e4] sm:$0xf] %vm1381, %v1374
  %1504 = vst.msk [vmem:[%s3 + $0x1e8] sm:$0xf] %vm1381, %v1375
  %1505 = vst.msk [vmem:[%s3 + $0x1ec] sm:$0xf] %vm1381, %v1376
  %1506 = vst.msk [vmem:[%s3 + $0x1f0] sm:$0xf] %vm1381, %v1377
  %1507 = vst.msk [vmem:[%s3 + $0x1f4] sm:$0xf] %vm1381, %v1378
  %1508 = vst.msk [vmem:[%s3 + $0x1f8] sm:$0xf] %vm1381, %v1379
  %1509 = vst.msk [vmem:[%s3 + $0x1fc] sm:$0xf] %vm1381, %v1380
  // Predicated region
  $region14: #{tpu_custom_call.1} parent=0 // pred_check
    _
  $region15: #{tpu_custom_call.1} parent=0 // pred_check_branch
    %1511 = sbr.rel (0) target = $region17
  $region16: #{tpu_custom_call.1} parent=0 // pred_region
    _
  $region17: #{tpu_custom_call.1} parent=0 // pred_fallthru
    _
  // Predicated region
  $region18: #{tpu_custom_call.1} parent=0 // pred_check
    _
  $region19: #{tpu_custom_call.1} parent=0 // pred_check_branch
    %1513 = sbr.rel (0) target = $region21
  $region20: #{tpu_custom_call.1} parent=0 // pred_region
    _
  $region21: #{tpu_custom_call.1} parent=0 // pred_fallthru
    _

</llo_original>
